<compile_context>
chip_gen: v7x
topology: tpu7x:2x2x1
jax: 0.10.0
libtpu: 0.0.40
codegen_flags: <defaults>
</compile_context>

<pallas_src>
import math
import functools

import jax
import jax.numpy as jnp
from jax.experimental import pallas as pl
from jax.experimental.pallas import tpu as pltpu


def _round_up(v, m):
    return ((v + m - 1) // m) * m


# --------------------- single fused transformer kernel ----------------------

def _fused_transformer_kernel(
    x_ref, mask_ref, w_qkv_ref, w_o_ref, w_ff1_ref, w_ff2_ref, vec_ref,
    dec_w_ref, o_ref, *, B, S, H, dh, L, F, NP, eps,
):
    """2 post-norm TransformerEncoderLayers + decoder Linear, all VMEM-resident."""
    D = H * dh
    x = x_ref[...]                                   # (B*S, D) f32
    mask = mask_ref[...][None, :, :]                 # (1, S, S) additive

    def layer_norm(z, g, b):
        mu = jnp.mean(z, axis=-1, keepdims=True)
        var = jnp.mean(jnp.square(z - mu), axis=-1, keepdims=True)
        return (z - mu) * jax.lax.rsqrt(var + eps) * g + b

    for l in range(L):                               # static unroll (L == 2)
        r = l * 8
        b_qkv = vec_ref[r + 0:r + 1, :3 * D]
        b_o   = vec_ref[r + 1:r + 2, :D]
        b_ff1 = vec_ref[r + 2:r + 3, :F]
        b_ff2 = vec_ref[r + 3:r + 4, :D]
        ln1_g = vec_ref[r + 4:r + 5, :D]
        ln1_b = vec_ref[r + 5:r + 6, :D]
        ln2_g = vec_ref[r + 6:r + 7, :D]
        ln2_b = vec_ref[r + 7:r + 8, :D]

        # ---- self attention (1/sqrt(dh) scale pre-folded into W_q / b_q) ----
        qkv = jnp.dot(x.astype(jnp.bfloat16), w_qkv_ref[l],
                      preferred_element_type=jnp.float32) + b_qkv     # (B*S, 3D)

        head_outs = []
        for h in range(H):                           # H == 2, static
            q = qkv[:, h * dh:(h + 1) * dh].reshape(B, S, dh).astype(jnp.bfloat16)
            k = qkv[:, D + h * dh:D + (h + 1) * dh].reshape(B, S, dh).astype(jnp.bfloat16)
            v = qkv[:, 2 * D + h * dh:2 * D + (h + 1) * dh].reshape(B, S, dh).astype(jnp.bfloat16)

            s = jnp.einsum("bqd,bkd->bqk", q, k,
                           preferred_element_type=jnp.float32) + mask
            m = jnp.max(s, axis=-1, keepdims=True)
            p = jnp.exp(s - m)
            p = p / jnp.sum(p, axis=-1, keepdims=True)        # exact divide
            o_h = jnp.einsum("bqk,bkd->bqd", p.astype(jnp.bfloat16), v,
                             preferred_element_type=jnp.float32)      # (B, S, dh)
            head_outs.append(o_h.reshape(B * S, dh))

        attn = jnp.concatenate(head_outs, axis=-1)            # head concat (B*S, D)
        attn = jnp.dot(attn.astype(jnp.bfloat16), w_o_ref[l],
                       preferred_element_type=jnp.float32) + b_o

        x = layer_norm(x + attn, ln1_g, ln1_b)

        # ---- feed forward (relu); d_hid zero-padded to lane-dense F ----
        hdn = jnp.dot(x.astype(jnp.bfloat16), w_ff1_ref[l],
                      preferred_element_type=jnp.float32) + b_ff1
        hdn = jnp.maximum(hdn, 0.0)
        ff = jnp.dot(hdn.astype(jnp.bfloat16), w_ff2_ref[l],
                     preferred_element_type=jnp.float32) + b_ff2

        x = layer_norm(x + ff, ln2_g, ln2_b)

    # ---- fused decoder linear: lane-dense (B*S, NP) logits store ----
    dec_b = vec_ref[L * 8:L * 8 + 1, :NP]
    logits = jnp.dot(x.astype(jnp.bfloat16), dec_w_ref[...],
                     preferred_element_type=jnp.float32) + dec_b
    o_ref[...] = logits.astype(o_ref.dtype)


def fused_transformer(x2d, src_mask, params, *, B, S, H, dh, L):
    F = params["w_ff1"].shape[-1]
    NP = params["dec_w"].shape[-1]
    kernel = functools.partial(_fused_transformer_kernel,
                               B=B, S=S, H=H, dh=dh, L=L, F=F, NP=NP, eps=1e-5)
    vmem = pl.BlockSpec(memory_space=pltpu.MemorySpace.VMEM)   # whole array in VMEM
    return pl.pallas_call(
        kernel,
        out_shape=jax.ShapeDtypeStruct((B * S, NP), jnp.float32),
        in_specs=[vmem] * 8,
        out_specs=vmem,
    )(x2d, src_mask, params["w_qkv"], params["w_o"], params["w_ff1"],
      params["w_ff2"], params["vec"], params["dec_w"])


# ----------------------------- parameter setup -----------------------------

def make_positional_encoding(d_model, max_len=5000):
    position = jnp.arange(max_len, dtype=jnp.float32)[:, None]
    div_term = jnp.exp(
        jnp.arange(0, d_model, 2, dtype=jnp.float32) * (-math.log(10000.0) / d_model))
    ang = position * div_term
    pe = jnp.stack([jnp.sin(ang), jnp.cos(ang)], axis=-1).reshape(max_len, d_model)
    return pe[:, None, :]                             # (max_len, 1, d_model)


def init_params(key, n_token, d_model, n_head, d_hid, n_layers):
    D = d_model
    dh = D // n_head
    scale = 1.0 / math.sqrt(dh)                       # 0.25 — exact in bf16
    f_pad = _round_up(d_hid, 128)                     # lane/MXU-aligned FFN width
    n_pad = _round_up(n_token, 128)                   # lane-dense logits
    vec_w = _round_up(max(f_pad, 3 * D, n_pad, 128), 128)
    n_rows = _round_up(n_layers * 8 + 1, 8)

    keys = jax.random.split(key, 2 + n_layers)
    u = lambda k, shape: jax.random.uniform(k, shape, jnp.float32, -0.1, 0.1)

    w_qkv, w_o, w_ff1, w_ff2 = [], [], [], []
    vec = jnp.zeros((n_rows, vec_w), jnp.float32)     # packed biases / LN params / dec_b
    for i in range(n_layers):
        lk = jax.random.split(keys[2 + i], 4)
        wq = u(lk[0], (D, 3 * D))
        wq = wq.at[:, :D].multiply(scale)             # fold attention scale into W_q
        w_qkv.append(wq)
        w_o.append(u(lk[1], (D, D)))
        w_ff1.append(jnp.zeros((D, f_pad), jnp.float32).at[:, :d_hid].set(
            u(lk[2], (D, d_hid))))
        w_ff2.append(jnp.zeros((f_pad, D), jnp.float32).at[:d_hid, :].set(
            u(lk[3], (d_hid, D))))
        r = i * 8
        # rows r..r+3: b_qkv (Q part would also get the scale fold; zeros here),
        #              b_o, b_ff1, b_ff2 — all zero-initialized
        # rows r+4..r+7: ln1_g, ln1_b, ln2_g, ln2_b
        vec = vec.at[r + 4, :D].set(1.0)
        vec = vec.at[r + 6, :D].set(1.0)
    # row n_layers*8: decoder bias (zeros, per init_weights)

    dec_w = jnp.zeros((D, n_pad), jnp.float32).at[:, :n_token].set(
        u(keys[1], (D, n_token)))

    return {
        "embedding": u(keys[0], (n_token, D)),
        "pe": make_positional_encoding(D),
        "w_qkv": jnp.stack(w_qkv).astype(jnp.bfloat16),
        "w_o": jnp.stack(w_o).astype(jnp.bfloat16),
        "w_ff1": jnp.stack(w_ff1).astype(jnp.bfloat16),
        "w_ff2": jnp.stack(w_ff2).astype(jnp.bfloat16),
        "vec": vec,
        "dec_w": dec_w.astype(jnp.bfloat16),
    }


# ------------------------------- forward pass -------------------------------

def transformer_forward(params, src, src_mask, *, d_model, n_head, n_token, n_layers):
    S, B = src.shape
    H = n_head
    dh = d_model // H

    # TODO(synk): embedding gather (data-dependent row lookup) stays in plain JAX;
    # the sqrt(d_model) scale, PE add and (S,B)->(B,S) relayout fuse with it in XLA.
    emb = jnp.take(params["embedding"], src, axis=0)            # (S, B, D)
    x = emb * math.sqrt(d_model) + params["pe"][:S]             # (S, B, D)
    x2d = x.transpose(1, 0, 2).reshape(B * S, d_model)          # batch-major rows

    logits_p = fused_transformer(x2d, src_mask, params,
                                 B=B, S=S, H=H, dh=dh, L=n_layers)
    logits = logits_p[:, :n_token]                              # drop vocab padding
    return logits.reshape(B, S, n_token).transpose(1, 0, 2)     # (S, B, n_token)


# ----------------------------------- main -----------------------------------

if __name__ == "__main__":
    SEQ, BATCH = 8, 2
    N_TOKEN, D_MODEL = 50, 32
    N_HEAD, D_HID, N_LAYERS = 2, 200, 2

    key = jax.random.PRNGKey(0)
    pkey, skey = jax.random.split(key)

    params = init_params(pkey, N_TOKEN, D_MODEL, N_HEAD, D_HID, N_LAYERS)

    src = jax.random.randint(skey, (SEQ, BATCH), 0, N_TOKEN, dtype=jnp.int32)
    # causal additive mask, like nn.Transformer.generate_square_subsequent_mask
    src_mask = jnp.where(
        jnp.triu(jnp.ones((SEQ, SEQ), dtype=bool), k=1), -1e9, 0.0
    ).astype(jnp.float32)

    fwd = jax.jit(functools.partial(
        transformer_forward, d_model=D_MODEL, n_head=N_HEAD,
        n_token=N_TOKEN, n_layers=N_LAYERS))
    out = fwd(params, src, src_mask)
    out = jax.block_until_ready(out)

    assert out.shape == (SEQ, BATCH, N_TOKEN), out.shape
    assert bool(jnp.all(jnp.isfinite(out)))
    print("KERNEL_OK")
</pallas_src>

<mosaic_0001>
module attributes {stable_mosaic.version = 11 : i64} {
  func.func @_fused_transformer_kernel(%arg0: memref<16x32xf32, #tpu.memory_space<vmem>>, %arg1: memref<8x8xf32, #tpu.memory_space<vmem>>, %arg2: memref<2x32x96xbf16, #tpu.memory_space<vmem>>, %arg3: memref<2x32x32xbf16, #tpu.memory_space<vmem>>, %arg4: memref<2x32x256xbf16, #tpu.memory_space<vmem>>, %arg5: memref<2x256x32xbf16, #tpu.memory_space<vmem>>, %arg6: memref<24x256xf32, #tpu.memory_space<vmem>>, %arg7: memref<32x128xbf16, #tpu.memory_space<vmem>>, %arg8: memref<16x128xf32, #tpu.memory_space<vmem>>) attributes {dimension_semantics = [], scalar_prefetch = 0 : i64, scratch_operands = 0 : i64, tpu.core_type = #tpu.core_type<tc>} {
    %c0 = arith.constant 0 : index
    %c0_0 = arith.constant 0 : index
    %0 = vector.load %arg0[%c0, %c0_0] : memref<16x32xf32, #tpu.memory_space<vmem>>, vector<16x32xf32>
    %c0_1 = arith.constant 0 : index
    %c0_2 = arith.constant 0 : index
    %1 = vector.load %arg1[%c0_1, %c0_2] : memref<8x8xf32, #tpu.memory_space<vmem>>, vector<8x8xf32>
    %2 = vector.shape_cast %1 : vector<8x8xf32> to vector<1x8x8xf32>
    %c0_3 = arith.constant 0 : index
    %c0_4 = arith.constant 0 : index
    %3 = vector.load %arg6[%c0_3, %c0_4] : memref<24x256xf32, #tpu.memory_space<vmem>>, vector<1x96xf32>
    %c1 = arith.constant 1 : index
    %c0_5 = arith.constant 0 : index
    %4 = vector.load %arg6[%c1, %c0_5] : memref<24x256xf32, #tpu.memory_space<vmem>>, vector<1x32xf32>
    %c2 = arith.constant 2 : index
    %c0_6 = arith.constant 0 : index
    %5 = vector.load %arg6[%c2, %c0_6] : memref<24x256xf32, #tpu.memory_space<vmem>>, vector<1x256xf32>
    %c3 = arith.constant 3 : index
    %c0_7 = arith.constant 0 : index
    %6 = vector.load %arg6[%c3, %c0_7] : memref<24x256xf32, #tpu.memory_space<vmem>>, vector<1x32xf32>
    %c4 = arith.constant 4 : index
    %c0_8 = arith.constant 0 : index
    %7 = vector.load %arg6[%c4, %c0_8] : memref<24x256xf32, #tpu.memory_space<vmem>>, vector<1x32xf32>
    %c5 = arith.constant 5 : index
    %c0_9 = arith.constant 0 : index
    %8 = vector.load %arg6[%c5, %c0_9] : memref<24x256xf32, #tpu.memory_space<vmem>>, vector<1x32xf32>
    %c6 = arith.constant 6 : index
    %c0_10 = arith.constant 0 : index
    %9 = vector.load %arg6[%c6, %c0_10] : memref<24x256xf32, #tpu.memory_space<vmem>>, vector<1x32xf32>
    %c7 = arith.constant 7 : index
    %c0_11 = arith.constant 0 : index
    %10 = vector.load %arg6[%c7, %c0_11] : memref<24x256xf32, #tpu.memory_space<vmem>>, vector<1x32xf32>
    %11 = arith.truncf %0 : vector<16x32xf32> to vector<16x32xbf16>
    %c0_12 = arith.constant 0 : index
    %c0_13 = arith.constant 0 : index
    %c0_14 = arith.constant 0 : index
    %12 = vector.load %arg2[%c0_12, %c0_13, %c0_14] : memref<2x32x96xbf16, #tpu.memory_space<vmem>>, vector<1x32x96xbf16>
    %13 = vector.shape_cast %12 : vector<1x32x96xbf16> to vector<32x96xbf16>
    %cst = arith.constant dense<0.000000e+00> : vector<16x96xf32>
    %14 = tpu.matmul %11, %13, %cst {dimension_numbers = #tpu.dot_dimension_numbers<[1], [0], [0], [1], [0, 0, 1, 1], [], []>} : vector<16x32xbf16>, vector<32x96xbf16>, vector<16x96xf32> -> vector<16x96xf32>
    %15 = vector.broadcast %3 : vector<1x96xf32> to vector<16x96xf32>
    %16 = arith.addf %14, %15 : vector<16x96xf32>
    %17 = vector.extract_strided_slice %16 {offsets = [0, 0], sizes = [16, 16], strides = [1, 1]} : vector<16x96xf32> to vector<16x16xf32>
    %18 = vector.shape_cast %17 : vector<16x16xf32> to vector<2x8x16xf32>
    %19 = arith.truncf %18 : vector<2x8x16xf32> to vector<2x8x16xbf16>
    %20 = vector.extract_strided_slice %16 {offsets = [0, 32], sizes = [16, 16], strides = [1, 1]} : vector<16x96xf32> to vector<16x16xf32>
    %21 = vector.shape_cast %20 : vector<16x16xf32> to vector<2x8x16xf32>
    %22 = arith.truncf %21 : vector<2x8x16xf32> to vector<2x8x16xbf16>
    %23 = vector.extract_strided_slice %16 {offsets = [0, 64], sizes = [16, 16], strides = [1, 1]} : vector<16x96xf32> to vector<16x16xf32>
    %24 = vector.shape_cast %23 : vector<16x16xf32> to vector<2x8x16xf32>
    %25 = arith.truncf %24 : vector<2x8x16xf32> to vector<2x8x16xbf16>
    "tpu.trace_start"() <{level = 10 : i32, message = "bqd,bkd->bqk"}> : () -> ()
    %cst_15 = arith.constant dense<0.000000e+00> : vector<2x8x8xf32>
    %26 = tpu.matmul %19, %22, %cst_15 {dimension_numbers = #tpu.dot_dimension_numbers<[2], [2], [1], [1], [0, 0, 0, 1, 1, 1], [0], [0]>} : vector<2x8x16xbf16>, vector<2x8x16xbf16>, vector<2x8x8xf32> -> vector<2x8x8xf32>
    "tpu.trace_stop"() : () -> ()
    %27 = vector.broadcast %2 : vector<1x8x8xf32> to vector<2x8x8xf32>
    %28 = arith.addf %26, %27 : vector<2x8x8xf32>
    %cst_16 = arith.constant dense<0xFF800000> : vector<2x8xf32>
    %29 = vector.multi_reduction <maximumf>, %28, %cst_16 [2] : vector<2x8x8xf32> to vector<2x8xf32>
    %30 = vector.shape_cast %29 : vector<2x8xf32> to vector<2x8x1xf32>
    %31 = vector.broadcast %30 : vector<2x8x1xf32> to vector<2x8x8xf32>
    %32 = arith.subf %28, %31 : vector<2x8x8xf32>
    %33 = math.exp %32 : vector<2x8x8xf32>
    %cst_17 = arith.constant dense<0.000000e+00> : vector<2x8xf32>
    %34 = vector.multi_reduction <add>, %33, %cst_17 [2] : vector<2x8x8xf32> to vector<2x8xf32>
    %35 = vector.shape_cast %34 : vector<2x8xf32> to vector<2x8x1xf32>
    %36 = vector.broadcast %35 : vector<2x8x1xf32> to vector<2x8x8xf32>
    %37 = arith.divf %33, %36 : vector<2x8x8xf32>
    %38 = arith.truncf %37 : vector<2x8x8xf32> to vector<2x8x8xbf16>
    "tpu.trace_start"() <{level = 10 : i32, message = "bqk,bkd->bqd"}> : () -> ()
    %cst_18 = arith.constant dense<0.000000e+00> : vector<2x8x16xf32>
    %39 = tpu.matmul %38, %25, %cst_18 {dimension_numbers = #tpu.dot_dimension_numbers<[2], [1], [1], [2], [0, 0, 0, 1, 1, 2], [0], [0]>} : vector<2x8x8xbf16>, vector<2x8x16xbf16>, vector<2x8x16xf32> -> vector<2x8x16xf32>
    "tpu.trace_stop"() : () -> ()
    %40 = vector.shape_cast %39 : vector<2x8x16xf32> to vector<16x16xf32>
    %41 = vector.extract_strided_slice %16 {offsets = [0, 16], sizes = [16, 16], strides = [1, 1]} : vector<16x96xf32> to vector<16x16xf32>
    %42 = vector.shape_cast %41 : vector<16x16xf32> to vector<2x8x16xf32>
    %43 = arith.truncf %42 : vector<2x8x16xf32> to vector<2x8x16xbf16>
    %44 = vector.extract_strided_slice %16 {offsets = [0, 48], sizes = [16, 16], strides = [1, 1]} : vector<16x96xf32> to vector<16x16xf32>
    %45 = vector.shape_cast %44 : vector<16x16xf32> to vector<2x8x16xf32>
    %46 = arith.truncf %45 : vector<2x8x16xf32> to vector<2x8x16xbf16>
    %47 = vector.extract_strided_slice %16 {offsets = [0, 80], sizes = [16, 16], strides = [1, 1]} : vector<16x96xf32> to vector<16x16xf32>
    %48 = vector.shape_cast %47 : vector<16x16xf32> to vector<2x8x16xf32>
    %49 = arith.truncf %48 : vector<2x8x16xf32> to vector<2x8x16xbf16>
    "tpu.trace_start"() <{level = 10 : i32, message = "bqd,bkd->bqk"}> : () -> ()
    %cst_19 = arith.constant dense<0.000000e+00> : vector<2x8x8xf32>
    %50 = tpu.matmul %43, %46, %cst_19 {dimension_numbers = #tpu.dot_dimension_numbers<[2], [2], [1], [1], [0, 0, 0, 1, 1, 1], [0], [0]>} : vector<2x8x16xbf16>, vector<2x8x16xbf16>, vector<2x8x8xf32> -> vector<2x8x8xf32>
    "tpu.trace_stop"() : () -> ()
    %51 = vector.broadcast %2 : vector<1x8x8xf32> to vector<2x8x8xf32>
    %52 = arith.addf %50, %51 : vector<2x8x8xf32>
    %cst_20 = arith.constant dense<0xFF800000> : vector<2x8xf32>
    %53 = vector.multi_reduction <maximumf>, %52, %cst_20 [2] : vector<2x8x8xf32> to vector<2x8xf32>
    %54 = vector.shape_cast %53 : vector<2x8xf32> to vector<2x8x1xf32>
    %55 = vector.broadcast %54 : vector<2x8x1xf32> to vector<2x8x8xf32>
    %56 = arith.subf %52, %55 : vector<2x8x8xf32>
    %57 = math.exp %56 : vector<2x8x8xf32>
    %cst_21 = arith.constant dense<0.000000e+00> : vector<2x8xf32>
    %58 = vector.multi_reduction <add>, %57, %cst_21 [2] : vector<2x8x8xf32> to vector<2x8xf32>
    %59 = vector.shape_cast %58 : vector<2x8xf32> to vector<2x8x1xf32>
    %60 = vector.broadcast %59 : vector<2x8x1xf32> to vector<2x8x8xf32>
    %61 = arith.divf %57, %60 : vector<2x8x8xf32>
    %62 = arith.truncf %61 : vector<2x8x8xf32> to vector<2x8x8xbf16>
    "tpu.trace_start"() <{level = 10 : i32, message = "bqk,bkd->bqd"}> : () -> ()
    %cst_22 = arith.constant dense<0.000000e+00> : vector<2x8x16xf32>
    %63 = tpu.matmul %62, %49, %cst_22 {dimension_numbers = #tpu.dot_dimension_numbers<[2], [1], [1], [2], [0, 0, 0, 1, 1, 2], [0], [0]>} : vector<2x8x8xbf16>, vector<2x8x16xbf16>, vector<2x8x16xf32> -> vector<2x8x16xf32>
    "tpu.trace_stop"() : () -> ()
    %64 = vector.shape_cast %63 : vector<2x8x16xf32> to vector<16x16xf32>
    %65 = tpu.concatenate %40, %64 in 1 : vector<16x16xf32>, vector<16x16xf32> -> vector<16x32xf32>
    %66 = arith.truncf %65 : vector<16x32xf32> to vector<16x32xbf16>
    %c0_23 = arith.constant 0 : index
    %c0_24 = arith.constant 0 : index
    %c0_25 = arith.constant 0 : index
    %67 = vector.load %arg3[%c0_23, %c0_24, %c0_25] : memref<2x32x32xbf16, #tpu.memory_space<vmem>>, vector<1x32x32xbf16>
    %68 = vector.shape_cast %67 : vector<1x32x32xbf16> to vector<32x32xbf16>
    %cst_26 = arith.constant dense<0.000000e+00> : vector<16x32xf32>
    %69 = tpu.matmul %66, %68, %cst_26 {dimension_numbers = #tpu.dot_dimension_numbers<[1], [0], [0], [1], [0, 0, 1, 1], [], []>} : vector<16x32xbf16>, vector<32x32xbf16>, vector<16x32xf32> -> vector<16x32xf32>
    %70 = vector.broadcast %4 : vector<1x32xf32> to vector<16x32xf32>
    %71 = arith.addf %69, %70 : vector<16x32xf32>
    %72 = arith.addf %0, %71 : vector<16x32xf32>
    %cst_27 = arith.constant dense<0.000000e+00> : vector<16xf32>
    %73 = vector.multi_reduction <add>, %72, %cst_27 [1] : vector<16x32xf32> to vector<16xf32>
    %74 = vector.shape_cast %73 : vector<16xf32> to vector<16x1xf32>
    %cst_28 = arith.constant 3.200000e+01 : f32
    %75 = vector.broadcast %cst_28 : f32 to vector<16x1xf32>
    %76 = arith.divf %74, %75 : vector<16x1xf32>
    %77 = vector.broadcast %76 : vector<16x1xf32> to vector<16x32xf32>
    %78 = arith.subf %72, %77 : vector<16x32xf32>
    %79 = arith.mulf %78, %78 : vector<16x32xf32>
    %cst_29 = arith.constant dense<0.000000e+00> : vector<16xf32>
    %80 = vector.multi_reduction <add>, %79, %cst_29 [1] : vector<16x32xf32> to vector<16xf32>
    %81 = vector.shape_cast %80 : vector<16xf32> to vector<16x1xf32>
    %cst_30 = arith.constant 3.200000e+01 : f32
    %82 = vector.broadcast %cst_30 : f32 to vector<16x1xf32>
    %83 = arith.divf %81, %82 : vector<16x1xf32>
    %84 = vector.broadcast %76 : vector<16x1xf32> to vector<16x32xf32>
    %85 = arith.subf %72, %84 : vector<16x32xf32>
    %cst_31 = arith.constant 9.99999974E-6 : f32
    %86 = vector.broadcast %cst_31 : f32 to vector<16x1xf32>
    %87 = arith.addf %83, %86 : vector<16x1xf32>
    %88 = math.rsqrt %87 : vector<16x1xf32>
    %89 = vector.broadcast %88 : vector<16x1xf32> to vector<16x32xf32>
    %90 = arith.mulf %85, %89 : vector<16x32xf32>
    %91 = vector.broadcast %7 : vector<1x32xf32> to vector<16x32xf32>
    %92 = arith.mulf %90, %91 : vector<16x32xf32>
    %93 = vector.broadcast %8 : vector<1x32xf32> to vector<16x32xf32>
    %94 = arith.addf %92, %93 : vector<16x32xf32>
    %95 = arith.truncf %94 : vector<16x32xf32> to vector<16x32xbf16>
    %c0_32 = arith.constant 0 : index
    %c0_33 = arith.constant 0 : index
    %c0_34 = arith.constant 0 : index
    %96 = vector.load %arg4[%c0_32, %c0_33, %c0_34] : memref<2x32x256xbf16, #tpu.memory_space<vmem>>, vector<1x32x256xbf16>
    %97 = vector.shape_cast %96 : vector<1x32x256xbf16> to vector<32x256xbf16>
    %cst_35 = arith.constant dense<0.000000e+00> : vector<16x256xf32>
    %98 = tpu.matmul %95, %97, %cst_35 {dimension_numbers = #tpu.dot_dimension_numbers<[1], [0], [0], [1], [0, 0, 1, 1], [], []>} : vector<16x32xbf16>, vector<32x256xbf16>, vector<16x256xf32> -> vector<16x256xf32>
    %99 = vector.broadcast %5 : vector<1x256xf32> to vector<16x256xf32>
    %100 = arith.addf %98, %99 : vector<16x256xf32>
    %cst_36 = arith.constant 0.000000e+00 : f32
    %101 = vector.broadcast %cst_36 : f32 to vector<16x256xf32>
    %102 = arith.maximumf %100, %101 : vector<16x256xf32>
    %103 = arith.truncf %102 : vector<16x256xf32> to vector<16x256xbf16>
    %c0_37 = arith.constant 0 : index
    %c0_38 = arith.constant 0 : index
    %c0_39 = arith.constant 0 : index
    %104 = vector.load %arg5[%c0_37, %c0_38, %c0_39] : memref<2x256x32xbf16, #tpu.memory_space<vmem>>, vector<1x256x32xbf16>
    %105 = vector.shape_cast %104 : vector<1x256x32xbf16> to vector<256x32xbf16>
    %cst_40 = arith.constant dense<0.000000e+00> : vector<16x32xf32>
    %106 = tpu.matmul %103, %105, %cst_40 {dimension_numbers = #tpu.dot_dimension_numbers<[1], [0], [0], [1], [0, 0, 1, 1], [], []>} : vector<16x256xbf16>, vector<256x32xbf16>, vector<16x32xf32> -> vector<16x32xf32>
    %107 = vector.broadcast %6 : vector<1x32xf32> to vector<16x32xf32>
    %108 = arith.addf %106, %107 : vector<16x32xf32>
    %109 = arith.addf %94, %108 : vector<16x32xf32>
    %cst_41 = arith.constant dense<0.000000e+00> : vector<16xf32>
    %110 = vector.multi_reduction <add>, %109, %cst_41 [1] : vector<16x32xf32> to vector<16xf32>
    %111 = vector.shape_cast %110 : vector<16xf32> to vector<16x1xf32>
    %cst_42 = arith.constant 3.200000e+01 : f32
    %112 = vector.broadcast %cst_42 : f32 to vector<16x1xf32>
    %113 = arith.divf %111, %112 : vector<16x1xf32>
    %114 = vector.broadcast %113 : vector<16x1xf32> to vector<16x32xf32>
    %115 = arith.subf %109, %114 : vector<16x32xf32>
    %116 = arith.mulf %115, %115 : vector<16x32xf32>
    %cst_43 = arith.constant dense<0.000000e+00> : vector<16xf32>
    %117 = vector.multi_reduction <add>, %116, %cst_43 [1] : vector<16x32xf32> to vector<16xf32>
    %118 = vector.shape_cast %117 : vector<16xf32> to vector<16x1xf32>
    %cst_44 = arith.constant 3.200000e+01 : f32
    %119 = vector.broadcast %cst_44 : f32 to vector<16x1xf32>
    %120 = arith.divf %118, %119 : vector<16x1xf32>
    %121 = vector.broadcast %113 : vector<16x1xf32> to vector<16x32xf32>
    %122 = arith.subf %109, %121 : vector<16x32xf32>
    %cst_45 = arith.constant 9.99999974E-6 : f32
    %123 = vector.broadcast %cst_45 : f32 to vector<16x1xf32>
    %124 = arith.addf %120, %123 : vector<16x1xf32>
    %125 = math.rsqrt %124 : vector<16x1xf32>
    %126 = vector.broadcast %125 : vector<16x1xf32> to vector<16x32xf32>
    %127 = arith.mulf %122, %126 : vector<16x32xf32>
    %128 = vector.broadcast %9 : vector<1x32xf32> to vector<16x32xf32>
    %129 = arith.mulf %127, %128 : vector<16x32xf32>
    %130 = vector.broadcast %10 : vector<1x32xf32> to vector<16x32xf32>
    %131 = arith.addf %129, %130 : vector<16x32xf32>
    %c8 = arith.constant 8 : index
    %c0_46 = arith.constant 0 : index
    %132 = vector.load %arg6[%c8, %c0_46] : memref<24x256xf32, #tpu.memory_space<vmem>>, vector<1x96xf32>
    %c9 = arith.constant 9 : index
    %c0_47 = arith.constant 0 : index
    %133 = vector.load %arg6[%c9, %c0_47] : memref<24x256xf32, #tpu.memory_space<vmem>>, vector<1x32xf32>
    %c10 = arith.constant 10 : index
    %c0_48 = arith.constant 0 : index
    %134 = vector.load %arg6[%c10, %c0_48] : memref<24x256xf32, #tpu.memory_space<vmem>>, vector<1x256xf32>
    %c11 = arith.constant 11 : index
    %c0_49 = arith.constant 0 : index
    %135 = vector.load %arg6[%c11, %c0_49] : memref<24x256xf32, #tpu.memory_space<vmem>>, vector<1x32xf32>
    %c12 = arith.constant 12 : index
    %c0_50 = arith.constant 0 : index
    %136 = vector.load %arg6[%c12, %c0_50] : memref<24x256xf32, #tpu.memory_space<vmem>>, vector<1x32xf32>
    %c13 = arith.constant 13 : index
    %c0_51 = arith.constant 0 : index
    %137 = vector.load %arg6[%c13, %c0_51] : memref<24x256xf32, #tpu.memory_space<vmem>>, vector<1x32xf32>
    %c14 = arith.constant 14 : index
    %c0_52 = arith.constant 0 : index
    %138 = vector.load %arg6[%c14, %c0_52] : memref<24x256xf32, #tpu.memory_space<vmem>>, vector<1x32xf32>
    %c15 = arith.constant 15 : index
    %c0_53 = arith.constant 0 : index
    %139 = vector.load %arg6[%c15, %c0_53] : memref<24x256xf32, #tpu.memory_space<vmem>>, vector<1x32xf32>
    %140 = arith.truncf %131 : vector<16x32xf32> to vector<16x32xbf16>
    %c1_54 = arith.constant 1 : index
    %c0_55 = arith.constant 0 : index
    %c0_56 = arith.constant 0 : index
    %141 = vector.load %arg2[%c1_54, %c0_55, %c0_56] : memref<2x32x96xbf16, #tpu.memory_space<vmem>>, vector<1x32x96xbf16>
    %142 = vector.shape_cast %141 : vector<1x32x96xbf16> to vector<32x96xbf16>
    %cst_57 = arith.constant dense<0.000000e+00> : vector<16x96xf32>
    %143 = tpu.matmul %140, %142, %cst_57 {dimension_numbers = #tpu.dot_dimension_numbers<[1], [0], [0], [1], [0, 0, 1, 1], [], []>} : vector<16x32xbf16>, vector<32x96xbf16>, vector<16x96xf32> -> vector<16x96xf32>
    %144 = vector.broadcast %132 : vector<1x96xf32> to vector<16x96xf32>
    %145 = arith.addf %143, %144 : vector<16x96xf32>
    %146 = vector.extract_strided_slice %145 {offsets = [0, 0], sizes = [16, 16], strides = [1, 1]} : vector<16x96xf32> to vector<16x16xf32>
    %147 = vector.shape_cast %146 : vector<16x16xf32> to vector<2x8x16xf32>
    %148 = arith.truncf %147 : vector<2x8x16xf32> to vector<2x8x16xbf16>
    %149 = vector.extract_strided_slice %145 {offsets = [0, 32], sizes = [16, 16], strides = [1, 1]} : vector<16x96xf32> to vector<16x16xf32>
    %150 = vector.shape_cast %149 : vector<16x16xf32> to vector<2x8x16xf32>
    %151 = arith.truncf %150 : vector<2x8x16xf32> to vector<2x8x16xbf16>
    %152 = vector.extract_strided_slice %145 {offsets = [0, 64], sizes = [16, 16], strides = [1, 1]} : vector<16x96xf32> to vector<16x16xf32>
    %153 = vector.shape_cast %152 : vector<16x16xf32> to vector<2x8x16xf32>
    %154 = arith.truncf %153 : vector<2x8x16xf32> to vector<2x8x16xbf16>
    "tpu.trace_start"() <{level = 10 : i32, message = "bqd,bkd->bqk"}> : () -> ()
    %cst_58 = arith.constant dense<0.000000e+00> : vector<2x8x8xf32>
    %155 = tpu.matmul %148, %151, %cst_58 {dimension_numbers = #tpu.dot_dimension_numbers<[2], [2], [1], [1], [0, 0, 0, 1, 1, 1], [0], [0]>} : vector<2x8x16xbf16>, vector<2x8x16xbf16>, vector<2x8x8xf32> -> vector<2x8x8xf32>
    "tpu.trace_stop"() : () -> ()
    %156 = vector.broadcast %2 : vector<1x8x8xf32> to vector<2x8x8xf32>
    %157 = arith.addf %155, %156 : vector<2x8x8xf32>
    %cst_59 = arith.constant dense<0xFF800000> : vector<2x8xf32>
    %158 = vector.multi_reduction <maximumf>, %157, %cst_59 [2] : vector<2x8x8xf32> to vector<2x8xf32>
    %159 = vector.shape_cast %158 : vector<2x8xf32> to vector<2x8x1xf32>
    %160 = vector.broadcast %159 : vector<2x8x1xf32> to vector<2x8x8xf32>
    %161 = arith.subf %157, %160 : vector<2x8x8xf32>
    %162 = math.exp %161 : vector<2x8x8xf32>
    %cst_60 = arith.constant dense<0.000000e+00> : vector<2x8xf32>
    %163 = vector.multi_reduction <add>, %162, %cst_60 [2] : vector<2x8x8xf32> to vector<2x8xf32>
    %164 = vector.shape_cast %163 : vector<2x8xf32> to vector<2x8x1xf32>
    %165 = vector.broadcast %164 : vector<2x8x1xf32> to vector<2x8x8xf32>
    %166 = arith.divf %162, %165 : vector<2x8x8xf32>
    %167 = arith.truncf %166 : vector<2x8x8xf32> to vector<2x8x8xbf16>
    "tpu.trace_start"() <{level = 10 : i32, message = "bqk,bkd->bqd"}> : () -> ()
    %cst_61 = arith.constant dense<0.000000e+00> : vector<2x8x16xf32>
    %168 = tpu.matmul %167, %154, %cst_61 {dimension_numbers = #tpu.dot_dimension_numbers<[2], [1], [1], [2], [0, 0, 0, 1, 1, 2], [0], [0]>} : vector<2x8x8xbf16>, vector<2x8x16xbf16>, vector<2x8x16xf32> -> vector<2x8x16xf32>
    "tpu.trace_stop"() : () -> ()
    %169 = vector.shape_cast %168 : vector<2x8x16xf32> to vector<16x16xf32>
    %170 = vector.extract_strided_slice %145 {offsets = [0, 16], sizes = [16, 16], strides = [1, 1]} : vector<16x96xf32> to vector<16x16xf32>
    %171 = vector.shape_cast %170 : vector<16x16xf32> to vector<2x8x16xf32>
    %172 = arith.truncf %171 : vector<2x8x16xf32> to vector<2x8x16xbf16>
    %173 = vector.extract_strided_slice %145 {offsets = [0, 48], sizes = [16, 16], strides = [1, 1]} : vector<16x96xf32> to vector<16x16xf32>
    %174 = vector.shape_cast %173 : vector<16x16xf32> to vector<2x8x16xf32>
    %175 = arith.truncf %174 : vector<2x8x16xf32> to vector<2x8x16xbf16>
    %176 = vector.extract_strided_slice %145 {offsets = [0, 80], sizes = [16, 16], strides = [1, 1]} : vector<16x96xf32> to vector<16x16xf32>
    %177 = vector.shape_cast %176 : vector<16x16xf32> to vector<2x8x16xf32>
    %178 = arith.truncf %177 : vector<2x8x16xf32> to vector<2x8x16xbf16>
    "tpu.trace_start"() <{level = 10 : i32, message = "bqd,bkd->bqk"}> : () -> ()
    %cst_62 = arith.constant dense<0.000000e+00> : vector<2x8x8xf32>
    %179 = tpu.matmul %172, %175, %cst_62 {dimension_numbers = #tpu.dot_dimension_numbers<[2], [2], [1], [1], [0, 0, 0, 1, 1, 1], [0], [0]>} : vector<2x8x16xbf16>, vector<2x8x16xbf16>, vector<2x8x8xf32> -> vector<2x8x8xf32>
    "tpu.trace_stop"() : () -> ()
    %180 = vector.broadcast %2 : vector<1x8x8xf32> to vector<2x8x8xf32>
    %181 = arith.addf %179, %180 : vector<2x8x8xf32>
    %cst_63 = arith.constant dense<0xFF800000> : vector<2x8xf32>
    %182 = vector.multi_reduction <maximumf>, %181, %cst_63 [2] : vector<2x8x8xf32> to vector<2x8xf32>
    %183 = vector.shape_cast %182 : vector<2x8xf32> to vector<2x8x1xf32>
    %184 = vector.broadcast %183 : vector<2x8x1xf32> to vector<2x8x8xf32>
    %185 = arith.subf %181, %184 : vector<2x8x8xf32>
    %186 = math.exp %185 : vector<2x8x8xf32>
    %cst_64 = arith.constant dense<0.000000e+00> : vector<2x8xf32>
    %187 = vector.multi_reduction <add>, %186, %cst_64 [2] : vector<2x8x8xf32> to vector<2x8xf32>
    %188 = vector.shape_cast %187 : vector<2x8xf32> to vector<2x8x1xf32>
    %189 = vector.broadcast %188 : vector<2x8x1xf32> to vector<2x8x8xf32>
    %190 = arith.divf %186, %189 : vector<2x8x8xf32>
    %191 = arith.truncf %190 : vector<2x8x8xf32> to vector<2x8x8xbf16>
    "tpu.trace_start"() <{level = 10 : i32, message = "bqk,bkd->bqd"}> : () -> ()
    %cst_65 = arith.constant dense<0.000000e+00> : vector<2x8x16xf32>
    %192 = tpu.matmul %191, %178, %cst_65 {dimension_numbers = #tpu.dot_dimension_numbers<[2], [1], [1], [2], [0, 0, 0, 1, 1, 2], [0], [0]>} : vector<2x8x8xbf16>, vector<2x8x16xbf16>, vector<2x8x16xf32> -> vector<2x8x16xf32>
    "tpu.trace_stop"() : () -> ()
    %193 = vector.shape_cast %192 : vector<2x8x16xf32> to vector<16x16xf32>
    %194 = tpu.concatenate %169, %193 in 1 : vector<16x16xf32>, vector<16x16xf32> -> vector<16x32xf32>
    %195 = arith.truncf %194 : vector<16x32xf32> to vector<16x32xbf16>
    %c1_66 = arith.constant 1 : index
    %c0_67 = arith.constant 0 : index
    %c0_68 = arith.constant 0 : index
    %196 = vector.load %arg3[%c1_66, %c0_67, %c0_68] : memref<2x32x32xbf16, #tpu.memory_space<vmem>>, vector<1x32x32xbf16>
    %197 = vector.shape_cast %196 : vector<1x32x32xbf16> to vector<32x32xbf16>
    %cst_69 = arith.constant dense<0.000000e+00> : vector<16x32xf32>
    %198 = tpu.matmul %195, %197, %cst_69 {dimension_numbers = #tpu.dot_dimension_numbers<[1], [0], [0], [1], [0, 0, 1, 1], [], []>} : vector<16x32xbf16>, vector<32x32xbf16>, vector<16x32xf32> -> vector<16x32xf32>
    %199 = vector.broadcast %133 : vector<1x32xf32> to vector<16x32xf32>
    %200 = arith.addf %198, %199 : vector<16x32xf32>
    %201 = arith.addf %131, %200 : vector<16x32xf32>
    %cst_70 = arith.constant dense<0.000000e+00> : vector<16xf32>
    %202 = vector.multi_reduction <add>, %201, %cst_70 [1] : vector<16x32xf32> to vector<16xf32>
    %203 = vector.shape_cast %202 : vector<16xf32> to vector<16x1xf32>
    %cst_71 = arith.constant 3.200000e+01 : f32
    %204 = vector.broadcast %cst_71 : f32 to vector<16x1xf32>
    %205 = arith.divf %203, %204 : vector<16x1xf32>
    %206 = vector.broadcast %205 : vector<16x1xf32> to vector<16x32xf32>
    %207 = arith.subf %201, %206 : vector<16x32xf32>
    %208 = arith.mulf %207, %207 : vector<16x32xf32>
    %cst_72 = arith.constant dense<0.000000e+00> : vector<16xf32>
    %209 = vector.multi_reduction <add>, %208, %cst_72 [1] : vector<16x32xf32> to vector<16xf32>
    %210 = vector.shape_cast %209 : vector<16xf32> to vector<16x1xf32>
    %cst_73 = arith.constant 3.200000e+01 : f32
    %211 = vector.broadcast %cst_73 : f32 to vector<16x1xf32>
    %212 = arith.divf %210, %211 : vector<16x1xf32>
    %213 = vector.broadcast %205 : vector<16x1xf32> to vector<16x32xf32>
    %214 = arith.subf %201, %213 : vector<16x32xf32>
    %cst_74 = arith.constant 9.99999974E-6 : f32
    %215 = vector.broadcast %cst_74 : f32 to vector<16x1xf32>
    %216 = arith.addf %212, %215 : vector<16x1xf32>
    %217 = math.rsqrt %216 : vector<16x1xf32>
    %218 = vector.broadcast %217 : vector<16x1xf32> to vector<16x32xf32>
    %219 = arith.mulf %214, %218 : vector<16x32xf32>
    %220 = vector.broadcast %136 : vector<1x32xf32> to vector<16x32xf32>
    %221 = arith.mulf %219, %220 : vector<16x32xf32>
    %222 = vector.broadcast %137 : vector<1x32xf32> to vector<16x32xf32>
    %223 = arith.addf %221, %222 : vector<16x32xf32>
    %224 = arith.truncf %223 : vector<16x32xf32> to vector<16x32xbf16>
    %c1_75 = arith.constant 1 : index
    %c0_76 = arith.constant 0 : index
    %c0_77 = arith.constant 0 : index
    %225 = vector.load %arg4[%c1_75, %c0_76, %c0_77] : memref<2x32x256xbf16, #tpu.memory_space<vmem>>, vector<1x32x256xbf16>
    %226 = vector.shape_cast %225 : vector<1x32x256xbf16> to vector<32x256xbf16>
    %cst_78 = arith.constant dense<0.000000e+00> : vector<16x256xf32>
    %227 = tpu.matmul %224, %226, %cst_78 {dimension_numbers = #tpu.dot_dimension_numbers<[1], [0], [0], [1], [0, 0, 1, 1], [], []>} : vector<16x32xbf16>, vector<32x256xbf16>, vector<16x256xf32> -> vector<16x256xf32>
    %228 = vector.broadcast %134 : vector<1x256xf32> to vector<16x256xf32>
    %229 = arith.addf %227, %228 : vector<16x256xf32>
    %cst_79 = arith.constant 0.000000e+00 : f32
    %230 = vector.broadcast %cst_79 : f32 to vector<16x256xf32>
    %231 = arith.maximumf %229, %230 : vector<16x256xf32>
    %232 = arith.truncf %231 : vector<16x256xf32> to vector<16x256xbf16>
    %c1_80 = arith.constant 1 : index
    %c0_81 = arith.constant 0 : index
    %c0_82 = arith.constant 0 : index
    %233 = vector.load %arg5[%c1_80, %c0_81, %c0_82] : memref<2x256x32xbf16, #tpu.memory_space<vmem>>, vector<1x256x32xbf16>
    %234 = vector.shape_cast %233 : vector<1x256x32xbf16> to vector<256x32xbf16>
    %cst_83 = arith.constant dense<0.000000e+00> : vector<16x32xf32>
    %235 = tpu.matmul %232, %234, %cst_83 {dimension_numbers = #tpu.dot_dimension_numbers<[1], [0], [0], [1], [0, 0, 1, 1], [], []>} : vector<16x256xbf16>, vector<256x32xbf16>, vector<16x32xf32> -> vector<16x32xf32>
    %236 = vector.broadcast %135 : vector<1x32xf32> to vector<16x32xf32>
    %237 = arith.addf %235, %236 : vector<16x32xf32>
    %238 = arith.addf %223, %237 : vector<16x32xf32>
    %cst_84 = arith.constant dense<0.000000e+00> : vector<16xf32>
    %239 = vector.multi_reduction <add>, %238, %cst_84 [1] : vector<16x32xf32> to vector<16xf32>
    %240 = vector.shape_cast %239 : vector<16xf32> to vector<16x1xf32>
    %cst_85 = arith.constant 3.200000e+01 : f32
    %241 = vector.broadcast %cst_85 : f32 to vector<16x1xf32>
    %242 = arith.divf %240, %241 : vector<16x1xf32>
    %243 = vector.broadcast %242 : vector<16x1xf32> to vector<16x32xf32>
    %244 = arith.subf %238, %243 : vector<16x32xf32>
    %245 = arith.mulf %244, %244 : vector<16x32xf32>
    %cst_86 = arith.constant dense<0.000000e+00> : vector<16xf32>
    %246 = vector.multi_reduction <add>, %245, %cst_86 [1] : vector<16x32xf32> to vector<16xf32>
    %247 = vector.shape_cast %246 : vector<16xf32> to vector<16x1xf32>
    %cst_87 = arith.constant 3.200000e+01 : f32
    %248 = vector.broadcast %cst_87 : f32 to vector<16x1xf32>
    %249 = arith.divf %247, %248 : vector<16x1xf32>
    %250 = vector.broadcast %242 : vector<16x1xf32> to vector<16x32xf32>
    %251 = arith.subf %238, %250 : vector<16x32xf32>
    %cst_88 = arith.constant 9.99999974E-6 : f32
    %252 = vector.broadcast %cst_88 : f32 to vector<16x1xf32>
    %253 = arith.addf %249, %252 : vector<16x1xf32>
    %254 = math.rsqrt %253 : vector<16x1xf32>
    %255 = vector.broadcast %254 : vector<16x1xf32> to vector<16x32xf32>
    %256 = arith.mulf %251, %255 : vector<16x32xf32>
    %257 = vector.broadcast %138 : vector<1x32xf32> to vector<16x32xf32>
    %258 = arith.mulf %256, %257 : vector<16x32xf32>
    %259 = vector.broadcast %139 : vector<1x32xf32> to vector<16x32xf32>
    %260 = arith.addf %258, %259 : vector<16x32xf32>
    %c16 = arith.constant 16 : index
    %c0_89 = arith.constant 0 : index
    %261 = vector.load %arg6[%c16, %c0_89] : memref<24x256xf32, #tpu.memory_space<vmem>>, vector<1x128xf32>
    %262 = arith.truncf %260 : vector<16x32xf32> to vector<16x32xbf16>
    %c0_90 = arith.constant 0 : index
    %c0_91 = arith.constant 0 : index
    %263 = vector.load %arg7[%c0_90, %c0_91] : memref<32x128xbf16, #tpu.memory_space<vmem>>, vector<32x128xbf16>
    %cst_92 = arith.constant dense<0.000000e+00> : vector<16x128xf32>
    %264 = tpu.matmul %262, %263, %cst_92 {dimension_numbers = #tpu.dot_dimension_numbers<[1], [0], [0], [1], [0, 0, 1, 1], [], []>} : vector<16x32xbf16>, vector<32x128xbf16>, vector<16x128xf32> -> vector<16x128xf32>
    %265 = vector.broadcast %261 : vector<1x128xf32> to vector<16x128xf32>
    %266 = arith.addf %264, %265 : vector<16x128xf32>
    %c0_93 = arith.constant 0 : index
    %c0_94 = arith.constant 0 : index
    %267 = vector.load %arg8[%c0_93, %c0_94] : memref<16x128xf32, #tpu.memory_space<vmem>>, vector<16x128xf32>
    tpu.vector_store %arg8[%c0_93, %c0_94], %266 {strides = array<i32>} : memref<16x128xf32, #tpu.memory_space<vmem>>, vector<16x128xf32>,
    return
  }
}

</mosaic_0001>

<llo_original>
// kernel: transformer_forward.1
$region0: #{transformer_forward.1}
  #allocation0 [shape = 'u32[]', space=smem, size = 0x4, offset = 0x4, fixed_abs, tag = 'smem constant byte address 0x4 - core index']
  #allocation1 [shape = 'u32[144,128]{1,0:T(1,128)}', space=vmem, size = 0x12000, scoped, tag = 'internal scratch']
  %s0 = inlined_call_operand.vmem [shape: f32[16,32], index: 0, kind: input, shape index: {}]
  %s1 = inlined_call_operand.vmem [shape: f32[8,8], index: 1, kind: input, shape index: {}]
  %s2 = inlined_call_operand.vmem [shape: bf16[2,32,96], index: 2, kind: input, shape index: {}]
  %s3 = inlined_call_operand.vmem [shape: bf16[2,32,32], index: 3, kind: input, shape index: {}]
  %s4 = inlined_call_operand.vmem [shape: bf16[2,32,256], index: 4, kind: input, shape index: {}]
  %s5 = inlined_call_operand.vmem [shape: bf16[2,256,32], index: 5, kind: input, shape index: {}]
  %s6 = inlined_call_operand.vmem [shape: f32[24,256], index: 6, kind: input, shape index: {}]
  %s7 = inlined_call_operand.vmem [shape: bf16[32,128], index: 7, kind: input, shape index: {}]
  %s8 = inlined_call_operand.vmem [shape: f32[16,128], index: 8, kind: output, shape index: {}]
  %s9 = sld [smem:[#allocation0]]
  $region42: #{transformer_forward.1} parent=0
    _
  %s11 = ssub.s32 1, %s9
  %s12 = scalar_select 0, %s11, %s9
  // Predicated region
  $region2: #{transformer_forward.1} parent=0 // pred_check
    _
  $region3: #{transformer_forward.1} parent=0 // pred_check_branch
    %14 = sbr.rel (0) target = $region5
  $region4: #{transformer_forward.1} parent=0 // pred_region
    _
  $region5: #{transformer_forward.1} parent=0 // pred_fallthru
    _
  // Predicated region
  $region6: #{transformer_forward.1} parent=0 // pred_check
    _
  $region7: #{transformer_forward.1} parent=0 // pred_check_branch
    %16 = sbr.rel (0) target = $region9
  $region8: #{transformer_forward.1} parent=0 // pred_region
    _
  $region9: #{transformer_forward.1} parent=0 // pred_fallthru
    _
  // Predicated region
  $region10: #{transformer_forward.1} parent=0 // pred_check
    _
  $region11: #{transformer_forward.1} parent=0 // pred_check_branch
    %18 = sbr.rel (0) target = $region13
  $region12: #{transformer_forward.1} parent=0 // pred_region
    _
  $region13: #{transformer_forward.1} parent=0 // pred_fallthru
    _
  // Predicated region
  $region14: #{transformer_forward.1} parent=0 // pred_check
    _
  $region15: #{transformer_forward.1} parent=0 // pred_check_branch
    %20 = sbr.rel (0) target = $region17
  $region16: #{transformer_forward.1} parent=0 // pred_region
    _
  $region17: #{transformer_forward.1} parent=0 // pred_fallthru
    _
  // Predicated region
  $region18: #{transformer_forward.1} parent=0 // pred_check
    _
  $region19: #{transformer_forward.1} parent=0 // pred_check_branch
    %22 = sbr.rel (0) target = $region21
  $region20: #{transformer_forward.1} parent=0 // pred_region
    _
  $region21: #{transformer_forward.1} parent=0 // pred_fallthru
    _
  // Predicated region
  $region22: #{transformer_forward.1} parent=0 // pred_check
    _
  $region23: #{transformer_forward.1} parent=0 // pred_check_branch
    %24 = sbr.rel (0) target = $region25
  $region24: #{transformer_forward.1} parent=0 // pred_region
    _
  $region25: #{transformer_forward.1} parent=0 // pred_fallthru
    _
  // Predicated region
  $region26: #{transformer_forward.1} parent=0 // pred_check
    _
  $region27: #{transformer_forward.1} parent=0 // pred_check_branch
    %26 = sbr.rel (0) target = $region29
  $region28: #{transformer_forward.1} parent=0 // pred_region
    _
  $region29: #{transformer_forward.1} parent=0 // pred_fallthru
    _
  // Predicated region
  $region30: #{transformer_forward.1} parent=0 // pred_check
    _
  $region31: #{transformer_forward.1} parent=0 // pred_check_branch
    %28 = sbr.rel (0) target = $region33
  $region32: #{transformer_forward.1} parent=0 // pred_region
    _
  $region33: #{transformer_forward.1} parent=0 // pred_fallthru
    _
  %v30 = vld [vmem:[%s0] sm:$0xff]
  %v31 = vld [vmem:[%s0 + $0x8] sm:$0xff]
  %v32 = vld [vmem:[%s1] sm:$0xff]
  %v33 = vld [vmem:[%s6] ss:$0 sm:$0xff]
  %v34 = vld [vmem:[%s6 + $0x1] ss:$0 sm:$0xff]
  %s35 = scalar_lea.vmem %s6, 2
  %v36 = vld [vmem:[%s35] ss:$8 sm:$0x3]
  %v37 = vld [vmem:[%s6 + $0x3] ss:$0 sm:$0xff]
  %v38 = vld [vmem:[%s6 + $0x4] ss:$0 sm:$0xff]
  %v39 = vld [vmem:[%s6 + $0x5] ss:$0 sm:$0xff]
  %v40 = vld [vmem:[%s6 + $0x6] ss:$0 sm:$0xff]
  %v41 = vld [vmem:[%s6 + $0x7] ss:$0 sm:$0xff]
  %v42 = vpack.c.bf16 %v31, %v30
  %v43 = vld [vmem:[%s2] sm:$0xf]
  %v44 = vld [vmem:[%s2 + $0x4] sm:$0xf]
  %v45 = vld [vmem:[%s2 + $0x8] sm:$0xf]
  %v46 = vld [vmem:[%s2 + $0xc] sm:$0xf]
  %v51 = vunpack.c.l.b16 %v43
  %v52 = vunpack.c.l.b16 %v44
  %v53 = vunpack.c.l.b16 %v45
  %v54 = vunpack.c.l.b16 %v46
  %v55 = vpack.c.b16 %v52, %v51
  %v56 = vpack.c.b16 %v54, %v53
  %vm59 = vcmask 261120
  %v61 = vsel %vm59, %v42, 0
  %63 = vmatprep.subr.bf16.mxu0 0
  %64 = vmatpush1.bf16.msra.mxu0 %v55
  %65 = vmatprep.subr.bf16.mxu0 0
  %66 = vmatpush1.bf16.msra.mxu0 %v56
  %67 = vmatprep.subr.bf16.mxu0 0
  %68 = vmatpush1.bf16.msra.mxu0 0
  %69 = vmatprep.subr.bf16.mxu0 0
  %70 = vmatpush1.bf16.msra.mxu0 0
  %71 = vmatprep.subr.bf16.mxu0 0
  %72 = vmatpush1.bf16.msra.mxu0 0
  %73 = vmatprep.subr.bf16.mxu0 0
  %74 = vmatpush1.bf16.msra.mxu0 0
  %75 = vmatprep.subr.bf16.mxu0 0
  %76 = vmatpush1.bf16.msra.mxu0 0
  %77 = vmatprep.subr.bf16.mxu0 0
  %78 = vmatpush1.bf16.msra.mxu0 0
  %79 = vmatprep.subr.bf16.mxu0 0
  %80 = vmatpush1.bf16.msra.mxu0 0
  %81 = vmatprep.subr.bf16.mxu0 0
  %82 = vmatpush1.bf16.msra.mxu0 0
  %83 = vmatprep.subr.bf16.mxu0 0
  %84 = vmatpush1.bf16.msra.mxu0 0
  %85 = vmatprep.subr.bf16.mxu0 0
  %86 = vmatpush1.bf16.msra.mxu0 0
  %87 = vmatprep.subr.bf16.mxu0 0
  %88 = vmatpush1.bf16.msra.mxu0 0
  %89 = vmatprep.subr.bf16.mxu0 0
  %90 = vmatpush1.bf16.msra.mxu0 0
  %91 = vmatprep.subr.bf16.mxu0 0
  %92 = vmatpush1.bf16.msra.mxu0 0
  %93 = vmatprep.subr.bf16.mxu0 0
  %94 = vmatpush1.bf16.msra.mxu0 0
  %95 = vmatprep.mubr.bf16.mxu0 0
  %96 = vmatmul.mubr.bf16.gmra.mrb[0].mxu0 %v61
  %v97 = vpop.f32.mrb[0].mxu0
  %v98 = vadd.f32 %v33, %v97
  %v99 = vpop.f32.mrb[0].mxu0
  %v100 = vpop.f32.mrb[0].mxu0
  %v101 = vadd.f32 %v33, %v100
  %v102 = vpop.f32.mrb[0].mxu0
  %103 = vdwg.mxu0
  %v104 = vpack.c.bf16 %v98, %v98
  %v105 = vpack.c.bf16 %v101, %v101
  %107 = vrot.lane.b32.xlu0 %v104, 96
  %v108 = vpop.permute.xlu0 %107
  %vm109 = vcmask 130048
  %v111 = vsel %vm109, %v104, 0
  %v114 = vsel %vm109, %v108, 0
  %116 = vmatprep.subr.bf16.mxu0 0
  %117 = vmatpush1.bf16.xpose.msra.mxu0 %v114
  %118 = vmatprep.subr.bf16.mxu0 0
  %119 = vmatpush1.bf16.xpose.msra.mxu0 0
  %120 = vmatprep.subr.bf16.mxu0 0
  %121 = vmatpush1.bf16.xpose.msra.mxu0 0
  %122 = vmatprep.subr.bf16.mxu0 0
  %123 = vmatpush1.bf16.xpose.msra.mxu0 0
  %124 = vmatprep.subr.bf16.mxu0 0
  %125 = vmatpush1.bf16.xpose.msra.mxu0 0
  %126 = vmatprep.subr.bf16.mxu0 0
  %127 = vmatpush1.bf16.xpose.msra.mxu0 0
  %128 = vmatprep.subr.bf16.mxu0 0
  %129 = vmatpush1.bf16.xpose.msra.mxu0 0
  %130 = vmatprep.subr.bf16.mxu0 0
  %131 = vmatpush1.bf16.xpose.msra.mxu0 0
  %132 = vmatprep.subr.bf16.mxu0 0
  %133 = vmatpush1.bf16.xpose.msra.mxu0 0
  %134 = vmatprep.subr.bf16.mxu0 0
  %135 = vmatpush1.bf16.xpose.msra.mxu0 0
  %136 = vmatprep.subr.bf16.mxu0 0
  %137 = vmatpush1.bf16.xpose.msra.mxu0 0
  %138 = vmatprep.subr.bf16.mxu0 0
  %139 = vmatpush1.bf16.xpose.msra.mxu0 0
  %140 = vmatprep.subr.bf16.mxu0 0
  %141 = vmatpush1.bf16.xpose.msra.mxu0 0
  %142 = vmatprep.subr.bf16.mxu0 0
  %143 = vmatpush1.bf16.xpose.msra.mxu0 0
  %144 = vmatprep.subr.bf16.mxu0 0
  %145 = vmatpush1.bf16.xpose.msra.mxu0 0
  %146 = vmatprep.subr.bf16.mxu0 0
  %147 = vmatpush1.bf16.xpose.msra.mxu0 0
  %148 = vmatprep.mubr.bf16.mxu0 0
  %149 = vmatmul.mubr.bf16.gmra.mrb[0].mxu0 %v111
  %v150 = vpop.f32.mrb[0].mxu0
  %v151 = vadd.f32 %v32, %v150
  %v152 = vpop.f32.mrb[0].mxu0
  %v153 = vpop.f32.mrb[0].mxu0
  %v154 = vpop.f32.mrb[0].mxu0
  %155 = vdwg.mxu0
  %157 = vrot.lane.b32.xlu0 %v105, 96
  %v158 = vpop.permute.xlu0 %157
  %v160 = vsel %vm109, %v105, 0
  %v163 = vsel %vm109, %v158, 0
  %165 = vmatprep.subr.bf16.mxu0 0
  %166 = vmatpush1.bf16.xpose.msra.mxu0 %v163
  %167 = vmatprep.subr.bf16.mxu0 0
  %168 = vmatpush1.bf16.xpose.msra.mxu0 0
  %169 = vmatprep.subr.bf16.mxu0 0
  %170 = vmatpush1.bf16.xpose.msra.mxu0 0
  %171 = vmatprep.subr.bf16.mxu0 0
  %172 = vmatpush1.bf16.xpose.msra.mxu0 0
  %173 = vmatprep.subr.bf16.mxu0 0
  %174 = vmatpush1.bf16.xpose.msra.mxu0 0
  %175 = vmatprep.subr.bf16.mxu0 0
  %176 = vmatpush1.bf16.xpose.msra.mxu0 0
  %177 = vmatprep.subr.bf16.mxu0 0
  %178 = vmatpush1.bf16.xpose.msra.mxu0 0
  %179 = vmatprep.subr.bf16.mxu0 0
  %180 = vmatpush1.bf16.xpose.msra.mxu0 0
  %181 = vmatprep.subr.bf16.mxu0 0
  %182 = vmatpush1.bf16.xpose.msra.mxu0 0
  %183 = vmatprep.subr.bf16.mxu0 0
  %184 = vmatpush1.bf16.xpose.msra.mxu0 0
  %185 = vmatprep.subr.bf16.mxu0 0
  %186 = vmatpush1.bf16.xpose.msra.mxu0 0
  %187 = vmatprep.subr.bf16.mxu0 0
  %188 = vmatpush1.bf16.xpose.msra.mxu0 0
  %189 = vmatprep.subr.bf16.mxu0 0
  %190 = vmatpush1.bf16.xpose.msra.mxu0 0
  %191 = vmatprep.subr.bf16.mxu0 0
  %192 = vmatpush1.bf16.xpose.msra.mxu0 0
  %193 = vmatprep.subr.bf16.mxu0 0
  %194 = vmatpush1.bf16.xpose.msra.mxu0 0
  %195 = vmatprep.subr.bf16.mxu0 0
  %196 = vmatpush1.bf16.xpose.msra.mxu0 0
  %197 = vmatprep.mubr.bf16.mxu0 0
  %198 = vmatmul.mubr.bf16.gmra.mrb[0].mxu0 %v160
  %v199 = vpop.f32.mrb[0].mxu0
  %v200 = vadd.f32 %v32, %v199
  %v201 = vpop.f32.mrb[0].mxu0
  %v202 = vpop.f32.mrb[0].mxu0
  %v203 = vpop.f32.mrb[0].mxu0
  %204 = vdwg.mxu0
  %vm205 = vcmask 64512
  %v206 = vsel %vm205, %v151, -inf
  %207 = vmax.xlane.f32.xlu0 %v206
  %v208 = vpop.xlane.xlu0 %207
  %v209 = vsel %vm205, %v200, -inf
  %210 = vmax.xlane.f32.xlu0 %v209
  %v211 = vpop.xlane.xlu0 %210
  %v212 = vsub.f32 %v151, %v208
  %v213 = vsub.f32 %v200, %v211
  %v214 = vmul.f32 %v212, 1.442695
  %v215 = vpow.pop %v214
  %v216 = vmul.f32 %v213, 1.442695
  %v217 = vpow.pop %v216
  %v218 = vsel %vm205, %v215, 0.0
  %219 = vadd.xlane.f32.xlu0 %v218
  %v220 = vpop.xlane.xlu0 %219
  %v221 = vsel %vm205, %v217, 0.0
  %222 = vadd.xlane.f32.xlu0 %v221
  %v223 = vpop.xlane.xlu0 %222
  %v224 = vrcp.pop %v220
  %v225 = vmul.f32 %v215, %v224
  %v226 = vrcp.pop %v223
  %v227 = vmul.f32 %v217, %v226
  %v228 = vpack.c.bf16 %v225, %v225
  %v229 = vpack.c.bf16 %v227, %v227
  %230 = vrot.lane.b32.xlu0 %v104, 64
  %v231 = vpop.permute.xlu0 %230
  %v233 = vsel %vm205, %v228, 0
  %vm235 = vcmask 1043456
  %v237 = vsel %vm235, %v231, 0
  %239 = vmatprep.subr.bf16.mxu0 0
  %240 = vmatpush1.bf16.msra.mxu0 %v237
  %241 = vmatprep.subr.bf16.mxu0 0
  %242 = vmatpush1.bf16.msra.mxu0 0
  %243 = vmatprep.subr.bf16.mxu0 0
  %244 = vmatpush1.bf16.msra.mxu0 0
  %245 = vmatprep.subr.bf16.mxu0 0
  %246 = vmatpush1.bf16.msra.mxu0 0
  %247 = vmatprep.subr.bf16.mxu0 0
  %248 = vmatpush1.bf16.msra.mxu0 0
  %249 = vmatprep.subr.bf16.mxu0 0
  %250 = vmatpush1.bf16.msra.mxu0 0
  %251 = vmatprep.subr.bf16.mxu0 0
  %252 = vmatpush1.bf16.msra.mxu0 0
  %253 = vmatprep.subr.bf16.mxu0 0
  %254 = vmatpush1.bf16.msra.mxu0 0
  %255 = vmatprep.subr.bf16.mxu0 0
  %256 = vmatpush1.bf16.msra.mxu0 0
  %257 = vmatprep.subr.bf16.mxu0 0
  %258 = vmatpush1.bf16.msra.mxu0 0
  %259 = vmatprep.subr.bf16.mxu0 0
  %260 = vmatpush1.bf16.msra.mxu0 0
  %261 = vmatprep.subr.bf16.mxu0 0
  %262 = vmatpush1.bf16.msra.mxu0 0
  %263 = vmatprep.subr.bf16.mxu0 0
  %264 = vmatpush1.bf16.msra.mxu0 0
  %265 = vmatprep.subr.bf16.mxu0 0
  %266 = vmatpush1.bf16.msra.mxu0 0
  %267 = vmatprep.subr.bf16.mxu0 0
  %268 = vmatpush1.bf16.msra.mxu0 0
  %269 = vmatprep.subr.bf16.mxu0 0
  %270 = vmatpush1.bf16.msra.mxu0 0
  %271 = vmatprep.mubr.bf16.mxu0 0
  %272 = vmatmul.mubr.bf16.gmra.mrb[0].mxu0 %v233
  %v273 = vpop.f32.mrb[0].mxu0
  %v274 = vadd.f32 0.0, %v273
  %v275 = vpop.f32.mrb[0].mxu0
  %v276 = vpop.f32.mrb[0].mxu0
  %v277 = vpop.f32.mrb[0].mxu0
  %278 = vdwg.mxu0
  %279 = vrot.lane.b32.xlu0 %v105, 64
  %v280 = vpop.permute.xlu0 %279
  %v282 = vsel %vm205, %v229, 0
  %v285 = vsel %vm235, %v280, 0
  %287 = vmatprep.subr.bf16.mxu0 0
  %288 = vmatpush1.bf16.msra.mxu0 %v285
  %289 = vmatprep.subr.bf16.mxu0 0
  %290 = vmatpush1.bf16.msra.mxu0 0
  %291 = vmatprep.subr.bf16.mxu0 0
  %292 = vmatpush1.bf16.msra.mxu0 0
  %293 = vmatprep.subr.bf16.mxu0 0
  %294 = vmatpush1.bf16.msra.mxu0 0
  %295 = vmatprep.subr.bf16.mxu0 0
  %296 = vmatpush1.bf16.msra.mxu0 0
  %297 = vmatprep.subr.bf16.mxu0 0
  %298 = vmatpush1.bf16.msra.mxu0 0
  %299 = vmatprep.subr.bf16.mxu0 0
  %300 = vmatpush1.bf16.msra.mxu0 0
  %301 = vmatprep.subr.bf16.mxu0 0
  %302 = vmatpush1.bf16.msra.mxu0 0
  %303 = vmatprep.subr.bf16.mxu0 0
  %304 = vmatpush1.bf16.msra.mxu0 0
  %305 = vmatprep.subr.bf16.mxu0 0
  %306 = vmatpush1.bf16.msra.mxu0 0
  %307 = vmatprep.subr.bf16.mxu0 0
  %308 = vmatpush1.bf16.msra.mxu0 0
  %309 = vmatprep.subr.bf16.mxu0 0
  %310 = vmatpush1.bf16.msra.mxu0 0
  %311 = vmatprep.subr.bf16.mxu0 0
  %312 = vmatpush1.bf16.msra.mxu0 0
  %313 = vmatprep.subr.bf16.mxu0 0
  %314 = vmatpush1.bf16.msra.mxu0 0
  %315 = vmatprep.subr.bf16.mxu0 0
  %316 = vmatpush1.bf16.msra.mxu0 0
  %317 = vmatprep.subr.bf16.mxu0 0
  %318 = vmatpush1.bf16.msra.mxu0 0
  %319 = vmatprep.mubr.bf16.mxu0 0
  %320 = vmatmul.mubr.bf16.gmra.mrb[0].mxu0 %v282
  %v321 = vpop.f32.mrb[0].mxu0
  %v322 = vadd.f32 0.0, %v321
  %v323 = vpop.f32.mrb[0].mxu0
  %v324 = vpop.f32.mrb[0].mxu0
  %v325 = vpop.f32.mrb[0].mxu0
  %326 = vdwg.mxu0
  %327 = vrot.lane.b32.xlu0 %v104, 112
  %v328 = vpop.permute.xlu0 %327
  %329 = vrot.lane.b32.xlu0 %v104, 80
  %v330 = vpop.permute.xlu0 %329
  %v332 = vsel %vm109, %v328, 0
  %v335 = vsel %vm109, %v330, 0
  %337 = vmatprep.subr.bf16.mxu0 0
  %338 = vmatpush1.bf16.xpose.msra.mxu0 %v335
  %339 = vmatprep.subr.bf16.mxu0 0
  %340 = vmatpush1.bf16.xpose.msra.mxu0 0
  %341 = vmatprep.subr.bf16.mxu0 0
  %342 = vmatpush1.bf16.xpose.msra.mxu0 0
  %343 = vmatprep.subr.bf16.mxu0 0
  %344 = vmatpush1.bf16.xpose.msra.mxu0 0
  %345 = vmatprep.subr.bf16.mxu0 0
  %346 = vmatpush1.bf16.xpose.msra.mxu0 0
  %347 = vmatprep.subr.bf16.mxu0 0
  %348 = vmatpush1.bf16.xpose.msra.mxu0 0
  %349 = vmatprep.subr.bf16.mxu0 0
  %350 = vmatpush1.bf16.xpose.msra.mxu0 0
  %351 = vmatprep.subr.bf16.mxu0 0
  %352 = vmatpush1.bf16.xpose.msra.mxu0 0
  %353 = vmatprep.subr.bf16.mxu0 0
  %354 = vmatpush1.bf16.xpose.msra.mxu0 0
  %355 = vmatprep.subr.bf16.mxu0 0
  %356 = vmatpush1.bf16.xpose.msra.mxu0 0
  %357 = vmatprep.subr.bf16.mxu0 0
  %358 = vmatpush1.bf16.xpose.msra.mxu0 0
  %359 = vmatprep.subr.bf16.mxu0 0
  %360 = vmatpush1.bf16.xpose.msra.mxu0 0
  %361 = vmatprep.subr.bf16.mxu0 0
  %362 = vmatpush1.bf16.xpose.msra.mxu0 0
  %363 = vmatprep.subr.bf16.mxu0 0
  %364 = vmatpush1.bf16.xpose.msra.mxu0 0
  %365 = vmatprep.subr.bf16.mxu0 0
  %366 = vmatpush1.bf16.xpose.msra.mxu0 0
  %367 = vmatprep.subr.bf16.mxu0 0
  %368 = vmatpush1.bf16.xpose.msra.mxu0 0
  %369 = vmatprep.mubr.bf16.mxu0 0
  %370 = vmatmul.mubr.bf16.gmra.mrb[0].mxu0 %v332
  %v371 = vpop.f32.mrb[0].mxu0
  %v372 = vadd.f32 %v32, %v371
  %v373 = vpop.f32.mrb[0].mxu0
  %v374 = vpop.f32.mrb[0].mxu0
  %v375 = vpop.f32.mrb[0].mxu0
  %376 = vdwg.mxu0
  %377 = vrot.lane.b32.xlu0 %v105, 112
  %v378 = vpop.permute.xlu0 %377
  %379 = vrot.lane.b32.xlu0 %v105, 80
  %v380 = vpop.permute.xlu0 %379
  %v382 = vsel %vm109, %v378, 0
  %v385 = vsel %vm109, %v380, 0
  %387 = vmatprep.subr.bf16.mxu0 0
  %388 = vmatpush1.bf16.xpose.msra.mxu0 %v385
  %389 = vmatprep.subr.bf16.mxu0 0
  %390 = vmatpush1.bf16.xpose.msra.mxu0 0
  %391 = vmatprep.subr.bf16.mxu0 0
  %392 = vmatpush1.bf16.xpose.msra.mxu0 0
  %393 = vmatprep.subr.bf16.mxu0 0
  %394 = vmatpush1.bf16.xpose.msra.mxu0 0
  %395 = vmatprep.subr.bf16.mxu0 0
  %396 = vmatpush1.bf16.xpose.msra.mxu0 0
  %397 = vmatprep.subr.bf16.mxu0 0
  %398 = vmatpush1.bf16.xpose.msra.mxu0 0
  %399 = vmatprep.subr.bf16.mxu0 0
  %400 = vmatpush1.bf16.xpose.msra.mxu0 0
  %401 = vmatprep.subr.bf16.mxu0 0
  %402 = vmatpush1.bf16.xpose.msra.mxu0 0
  %403 = vmatprep.subr.bf16.mxu0 0
  %404 = vmatpush1.bf16.xpose.msra.mxu0 0
  %405 = vmatprep.subr.bf16.mxu0 0
  %406 = vmatpush1.bf16.xpose.msra.mxu0 0
  %407 = vmatprep.subr.bf16.mxu0 0
  %408 = vmatpush1.bf16.xpose.msra.mxu0 0
  %409 = vmatprep.subr.bf16.mxu0 0
  %410 = vmatpush1.bf16.xpose.msra.mxu0 0
  %411 = vmatprep.subr.bf16.mxu0 0
  %412 = vmatpush1.bf16.xpose.msra.mxu0 0
  %413 = vmatprep.subr.bf16.mxu0 0
  %414 = vmatpush1.bf16.xpose.msra.mxu0 0
  %415 = vmatprep.subr.bf16.mxu0 0
  %416 = vmatpush1.bf16.xpose.msra.mxu0 0
  %417 = vmatprep.subr.bf16.mxu0 0
  %418 = vmatpush1.bf16.xpose.msra.mxu0 0
  %419 = vmatprep.mubr.bf16.mxu0 0
  %420 = vmatmul.mubr.bf16.gmra.mrb[0].mxu0 %v382
  %v421 = vpop.f32.mrb[0].mxu0
  %v422 = vadd.f32 %v32, %v421
  %v423 = vpop.f32.mrb[0].mxu0
  %v424 = vpop.f32.mrb[0].mxu0
  %v425 = vpop.f32.mrb[0].mxu0
  %426 = vdwg.mxu0
  %v427 = vsel %vm205, %v372, -inf
  %428 = vmax.xlane.f32.xlu0 %v427
  %v429 = vpop.xlane.xlu0 %428
  %v430 = vsel %vm205, %v422, -inf
  %431 = vmax.xlane.f32.xlu0 %v430
  %v432 = vpop.xlane.xlu0 %431
  %v433 = vsub.f32 %v372, %v429
  %v434 = vsub.f32 %v422, %v432
  %v435 = vmul.f32 %v433, 1.442695
  %v436 = vpow.pop %v435
  %v437 = vmul.f32 %v434, 1.442695
  %v438 = vpow.pop %v437
  %v439 = vsel %vm205, %v436, 0.0
  %440 = vadd.xlane.f32.xlu0 %v439
  %v441 = vpop.xlane.xlu0 %440
  %v442 = vsel %vm205, %v438, 0.0
  %443 = vadd.xlane.f32.xlu0 %v442
  %v444 = vpop.xlane.xlu0 %443
  %v445 = vrcp.pop %v441
  %v446 = vmul.f32 %v436, %v445
  %v447 = vrcp.pop %v444
  %v448 = vmul.f32 %v438, %v447
  %v449 = vpack.c.bf16 %v446, %v446
  %v450 = vpack.c.bf16 %v448, %v448
  %451 = vrot.lane.b32.xlu0 %v104, 48
  %v452 = vpop.permute.xlu0 %451
  %v454 = vsel %vm205, %v449, 0
  %v457 = vsel %vm235, %v452, 0
  %459 = vmatprep.subr.bf16.mxu0 0
  %460 = vmatpush1.bf16.msra.mxu0 %v457
  %461 = vmatprep.subr.bf16.mxu0 0
  %462 = vmatpush1.bf16.msra.mxu0 0
  %463 = vmatprep.subr.bf16.mxu0 0
  %464 = vmatpush1.bf16.msra.mxu0 0
  %465 = vmatprep.subr.bf16.mxu0 0
  %466 = vmatpush1.bf16.msra.mxu0 0
  %467 = vmatprep.subr.bf16.mxu0 0
  %468 = vmatpush1.bf16.msra.mxu0 0
  %469 = vmatprep.subr.bf16.mxu0 0
  %470 = vmatpush1.bf16.msra.mxu0 0
  %471 = vmatprep.subr.bf16.mxu0 0
  %472 = vmatpush1.bf16.msra.mxu0 0
  %473 = vmatprep.subr.bf16.mxu0 0
  %474 = vmatpush1.bf16.msra.mxu0 0
  %475 = vmatprep.subr.bf16.mxu0 0
  %476 = vmatpush1.bf16.msra.mxu0 0
  %477 = vmatprep.subr.bf16.mxu0 0
  %478 = vmatpush1.bf16.msra.mxu0 0
  %479 = vmatprep.subr.bf16.mxu0 0
  %480 = vmatpush1.bf16.msra.mxu0 0
  %481 = vmatprep.subr.bf16.mxu0 0
  %482 = vmatpush1.bf16.msra.mxu0 0
  %483 = vmatprep.subr.bf16.mxu0 0
  %484 = vmatpush1.bf16.msra.mxu0 0
  %485 = vmatprep.subr.bf16.mxu0 0
  %486 = vmatpush1.bf16.msra.mxu0 0
  %487 = vmatprep.subr.bf16.mxu0 0
  %488 = vmatpush1.bf16.msra.mxu0 0
  %489 = vmatprep.subr.bf16.mxu0 0
  %490 = vmatpush1.bf16.msra.mxu0 0
  %491 = vmatprep.mubr.bf16.mxu0 0
  %492 = vmatmul.mubr.bf16.gmra.mrb[0].mxu0 %v454
  %v493 = vpop.f32.mrb[0].mxu0
  %v494 = vadd.f32 0.0, %v493
  %v495 = vpop.f32.mrb[0].mxu0
  %v496 = vpop.f32.mrb[0].mxu0
  %v497 = vpop.f32.mrb[0].mxu0
  %498 = vdwg.mxu0
  %499 = vrot.lane.b32.xlu0 %v105, 48
  %v500 = vpop.permute.xlu0 %499
  %v502 = vsel %vm205, %v450, 0
  %v505 = vsel %vm235, %v500, 0
  %507 = vmatprep.subr.bf16.mxu0 0
  %508 = vmatpush1.bf16.msra.mxu0 %v505
  %509 = vmatprep.subr.bf16.mxu0 0
  %510 = vmatpush1.bf16.msra.mxu0 0
  %511 = vmatprep.subr.bf16.mxu0 0
  %512 = vmatpush1.bf16.msra.mxu0 0
  %513 = vmatprep.subr.bf16.mxu0 0
  %514 = vmatpush1.bf16.msra.mxu0 0
  %515 = vmatprep.subr.bf16.mxu0 0
  %516 = vmatpush1.bf16.msra.mxu0 0
  %517 = vmatprep.subr.bf16.mxu0 0
  %518 = vmatpush1.bf16.msra.mxu0 0
  %519 = vmatprep.subr.bf16.mxu0 0
  %520 = vmatpush1.bf16.msra.mxu0 0
  %521 = vmatprep.subr.bf16.mxu0 0
  %522 = vmatpush1.bf16.msra.mxu0 0
  %523 = vmatprep.subr.bf16.mxu0 0
  %524 = vmatpush1.bf16.msra.mxu0 0
  %525 = vmatprep.subr.bf16.mxu0 0
  %526 = vmatpush1.bf16.msra.mxu0 0
  %527 = vmatprep.subr.bf16.mxu0 0
  %528 = vmatpush1.bf16.msra.mxu0 0
  %529 = vmatprep.subr.bf16.mxu0 0
  %530 = vmatpush1.bf16.msra.mxu0 0
  %531 = vmatprep.subr.bf16.mxu0 0
  %532 = vmatpush1.bf16.msra.mxu0 0
  %533 = vmatprep.subr.bf16.mxu0 0
  %534 = vmatpush1.bf16.msra.mxu0 0
  %535 = vmatprep.subr.bf16.mxu0 0
  %536 = vmatpush1.bf16.msra.mxu0 0
  %537 = vmatprep.subr.bf16.mxu0 0
  %538 = vmatpush1.bf16.msra.mxu0 0
  %539 = vmatprep.mubr.bf16.mxu0 0
  %540 = vmatmul.mubr.bf16.gmra.mrb[0].mxu0 %v502
  %v541 = vpop.f32.mrb[0].mxu0
  %v542 = vadd.f32 0.0, %v541
  %v543 = vpop.f32.mrb[0].mxu0
  %v544 = vpop.f32.mrb[0].mxu0
  %v545 = vpop.f32.mrb[0].mxu0
  %546 = vdwg.mxu0
  %549 = vrot.lane.b32.xlu0 %v494, 16
  %v550 = vpop.permute.xlu0 %549
  %551 = vrot.lane.b32.xlu0 %v542, 16
  %v552 = vpop.permute.xlu0 %551
  %v555 = vsel %vm109, %v274, %v550
  %v556 = vsel %vm109, %v322, %v552
  %v557 = vpack.c.bf16 %v556, %v555
  %v558 = vld [vmem:[%s3] sm:$0xf]
  %v559 = vld [vmem:[%s3 + $0x4] sm:$0xf]
  %v560 = vld [vmem:[%s3 + $0x8] sm:$0xf]
  %v561 = vld [vmem:[%s3 + $0xc] sm:$0xf]
  %v566 = vunpack.c.l.b16 %v558
  %v567 = vunpack.c.l.b16 %v559
  %v568 = vunpack.c.l.b16 %v560
  %v569 = vunpack.c.l.b16 %v561
  %v570 = vpack.c.b16 %v567, %v566
  %v571 = vpack.c.b16 %v569, %v568
  %v575 = vsel %vm59, %v557, 0
  %577 = vmatprep.subr.bf16.mxu0 0
  %578 = vmatpush1.bf16.msra.mxu0 %v570
  %579 = vmatprep.subr.bf16.mxu0 0
  %580 = vmatpush1.bf16.msra.mxu0 %v571
  %581 = vmatprep.subr.bf16.mxu0 0
  %582 = vmatpush1.bf16.msra.mxu0 0
  %583 = vmatprep.subr.bf16.mxu0 0
  %584 = vmatpush1.bf16.msra.mxu0 0
  %585 = vmatprep.subr.bf16.mxu0 0
  %586 = vmatpush1.bf16.msra.mxu0 0
  %587 = vmatprep.subr.bf16.mxu0 0
  %588 = vmatpush1.bf16.msra.mxu0 0
  %589 = vmatprep.subr.bf16.mxu0 0
  %590 = vmatpush1.bf16.msra.mxu0 0
  %591 = vmatprep.subr.bf16.mxu0 0
  %592 = vmatpush1.bf16.msra.mxu0 0
  %593 = vmatprep.subr.bf16.mxu0 0
  %594 = vmatpush1.bf16.msra.mxu0 0
  %595 = vmatprep.subr.bf16.mxu0 0
  %596 = vmatpush1.bf16.msra.mxu0 0
  %597 = vmatprep.subr.bf16.mxu0 0
  %598 = vmatpush1.bf16.msra.mxu0 0
  %599 = vmatprep.subr.bf16.mxu0 0
  %600 = vmatpush1.bf16.msra.mxu0 0
  %601 = vmatprep.subr.bf16.mxu0 0
  %602 = vmatpush1.bf16.msra.mxu0 0
  %603 = vmatprep.subr.bf16.mxu0 0
  %604 = vmatpush1.bf16.msra.mxu0 0
  %605 = vmatprep.subr.bf16.mxu0 0
  %606 = vmatpush1.bf16.msra.mxu0 0
  %607 = vmatprep.subr.bf16.mxu0 0
  %608 = vmatpush1.bf16.msra.mxu0 0
  %609 = vmatprep.mubr.bf16.mxu0 0
  %610 = vmatmul.mubr.bf16.gmra.mrb[0].mxu0 %v575
  %v611 = vpop.f32.mrb[0].mxu0
  %v612 = vadd.f32 %v34, %v611
  %v613 = vpop.f32.mrb[0].mxu0
  %v614 = vpop.f32.mrb[0].mxu0
  %v615 = vadd.f32 %v34, %v614
  %v616 = vpop.f32.mrb[0].mxu0
  %617 = vdwg.mxu0
  %v618 = vadd.f32 %v30, %v612
  %v619 = vadd.f32 %v31, %v615
  %v620 = vsel %vm59, %v618, 0.0
  %621 = vadd.xlane.f32.xlu0 %v620
  %v622 = vpop.xlane.xlu0 %621
  %v623 = vsel %vm59, %v619, 0.0
  %624 = vadd.xlane.f32.xlu0 %v623
  %v625 = vpop.xlane.xlu0 %624
  %v626 = vrcp.pop 32.0
  %v627 = vmul.f32 %v622, %v626
  %v628 = vmul.f32 %v625, %v626
  %v629 = vsub.f32 %v618, %v627
  %v630 = vsub.f32 %v619, %v628
  %v631 = vmul.f32 %v629, %v629
  %v632 = vmul.f32 %v630, %v630
  %v633 = vsel %vm59, %v631, 0.0
  %634 = vadd.xlane.f32.xlu0 %v633
  %v635 = vpop.xlane.xlu0 %634
  %v636 = vsel %vm59, %v632, 0.0
  %637 = vadd.xlane.f32.xlu0 %v636
  %v638 = vpop.xlane.xlu0 %637
  %v639 = vmul.f32 %v635, %v626
  %v640 = vmul.f32 %v638, %v626
  %v641 = vadd.f32 %v639, 1e-05
  %v642 = vadd.f32 %v640, 1e-05
  %v643 = vrsqrt.pop %v641
  %v644 = vrsqrt.pop %v642
  %v645 = vmul.f32 %v629, %v643
  %v646 = vmul.f32 %v630, %v644
  %v647 = vmul.f32 %v645, %v38
  %v648 = vmul.f32 %v646, %v38
  %v649 = vadd.f32 %v647, %v39
  %v650 = vadd.f32 %v648, %v39
  %v651 = vpack.c.bf16 %v650, %v649
  %v652 = vld [vmem:[%s4] sm:$0xff]
  %v653 = vld [vmem:[%s4 + $0x8] sm:$0xff]
  %v654 = vld [vmem:[%s4 + $0x10] sm:$0xff]
  %v655 = vld [vmem:[%s4 + $0x18] sm:$0xff]
  %v657 = vlaneseq
  %v658 = vshrl.u32 %v657, 7
  %v659 = vsub.s32 0, %v658
  %v660 = vrot.slane %v36, %v659
  %v661 = vlaneseq
  %v662 = vshrl.u32 %v661, 7
  %v663 = vsub.s32 1, %v662
  %v664 = vrot.slane %v36, %v663
  %v671 = vunpack.c.l.b16 %v652
  %v672 = vunpack.c.h.b16 %v652
  %v673 = vunpack.c.l.b16 %v653
  %v674 = vunpack.c.h.b16 %v653
  %v675 = vunpack.c.l.b16 %v654
  %v676 = vunpack.c.h.b16 %v654
  %v677 = vunpack.c.l.b16 %v655
  %v678 = vunpack.c.h.b16 %v655
  %v679 = vpack.c.b16 %v673, %v671
  %v680 = vpack.c.b16 %v674, %v672
  %v681 = vpack.c.b16 %v677, %v675
  %v682 = vpack.c.b16 %v678, %v676
  %v688 = vsel %vm59, %v651, 0
  %690 = vmatprep.subr.bf16.mxu0 %v680
  %691 = vmatpush1.bf16.msra.mxu0 %v679
  %692 = vmatprep.subr.bf16.mxu0 %v682
  %693 = vmatpush1.bf16.msra.mxu0 %v681
  %694 = vmatprep.subr.bf16.mxu0 0
  %695 = vmatpush1.bf16.msra.mxu0 0
  %696 = vmatprep.subr.bf16.mxu0 0
  %697 = vmatpush1.bf16.msra.mxu0 0
  %698 = vmatprep.subr.bf16.mxu0 0
  %699 = vmatpush1.bf16.msra.mxu0 0
  %700 = vmatprep.subr.bf16.mxu0 0
  %701 = vmatpush1.bf16.msra.mxu0 0
  %702 = vmatprep.subr.bf16.mxu0 0
  %703 = vmatpush1.bf16.msra.mxu0 0
  %704 = vmatprep.subr.bf16.mxu0 0
  %705 = vmatpush1.bf16.msra.mxu0 0
  %706 = vmatprep.subr.bf16.mxu0 0
  %707 = vmatpush1.bf16.msra.mxu0 0
  %708 = vmatprep.subr.bf16.mxu0 0
  %709 = vmatpush1.bf16.msra.mxu0 0
  %710 = vmatprep.subr.bf16.mxu0 0
  %711 = vmatpush1.bf16.msra.mxu0 0
  %712 = vmatprep.subr.bf16.mxu0 0
  %713 = vmatpush1.bf16.msra.mxu0 0
  %714 = vmatprep.subr.bf16.mxu0 0
  %715 = vmatpush1.bf16.msra.mxu0 0
  %716 = vmatprep.subr.bf16.mxu0 0
  %717 = vmatpush1.bf16.msra.mxu0 0
  %718 = vmatprep.subr.bf16.mxu0 0
  %719 = vmatpush1.bf16.msra.mxu0 0
  %720 = vmatprep.subr.bf16.mxu0 0
  %721 = vmatpush1.bf16.msra.mxu0 0
  %722 = vmatprep.mubr.bf16.mxu0 0
  %723 = vmatmul.mubr.bf16.gmra.mrb[0].mxu0 %v688
  %v724 = vpop.f32.mrb[0].mxu0
  %v725 = vadd.f32 %v660, %v724
  %v726 = vpop.f32.mrb[0].mxu0
  %v727 = vadd.f32 %v664, %v726
  %v728 = vpop.f32.mrb[0].mxu0
  %v729 = vadd.f32 %v660, %v728
  %v730 = vpop.f32.mrb[0].mxu0
  %v731 = vadd.f32 %v664, %v730
  %732 = vdwg.mxu0
  %v733 = vmax.f32 %v725, 0.0
  %v734 = vmax.f32 %v727, 0.0
  %v735 = vmax.f32 %v729, 0.0
  %v736 = vmax.f32 %v731, 0.0
  %v737 = vpack.c.bf16 %v735, %v733
  %v738 = vpack.c.bf16 %v736, %v734
  %v739 = vld [vmem:[%s5] sm:$0xf]
  %v740 = vld [vmem:[%s5 + $0x4] sm:$0xf]
  %v741 = vld [vmem:[%s5 + $0x8] sm:$0xf]
  %v742 = vld [vmem:[%s5 + $0xc] sm:$0xf]
  %v743 = vld [vmem:[%s5 + $0x10] sm:$0xf]
  %v744 = vld [vmem:[%s5 + $0x14] sm:$0xf]
  %v745 = vld [vmem:[%s5 + $0x18] sm:$0xf]
  %v746 = vld [vmem:[%s5 + $0x1c] sm:$0xf]
  %v747 = vld [vmem:[%s5 + $0x20] sm:$0xf]
  %v748 = vld [vmem:[%s5 + $0x24] sm:$0xf]
  %v749 = vld [vmem:[%s5 + $0x28] sm:$0xf]
  %v750 = vld [vmem:[%s5 + $0x2c] sm:$0xf]
  %v751 = vld [vmem:[%s5 + $0x30] sm:$0xf]
  %v752 = vld [vmem:[%s5 + $0x34] sm:$0xf]
  %v753 = vld [vmem:[%s5 + $0x38] sm:$0xf]
  %v754 = vld [vmem:[%s5 + $0x3c] sm:$0xf]
  %v755 = vld [vmem:[%s5 + $0x40] sm:$0xf]
  %v756 = vld [vmem:[%s5 + $0x44] sm:$0xf]
  %v757 = vld [vmem:[%s5 + $0x48] sm:$0xf]
  %v758 = vld [vmem:[%s5 + $0x4c] sm:$0xf]
  %v759 = vld [vmem:[%s5 + $0x50] sm:$0xf]
  %v760 = vld [vmem:[%s5 + $0x54] sm:$0xf]
  %v761 = vld [vmem:[%s5 + $0x58] sm:$0xf]
  %v762 = vld [vmem:[%s5 + $0x5c] sm:$0xf]
  %v763 = vld [vmem:[%s5 + $0x60] sm:$0xf]
  %v764 = vld [vmem:[%s5 + $0x64] sm:$0xf]
  %v765 = vld [vmem:[%s5 + $0x68] sm:$0xf]
  %v766 = vld [vmem:[%s5 + $0x6c] sm:$0xf]
  %v767 = vld [vmem:[%s5 + $0x70] sm:$0xf]
  %v768 = vld [vmem:[%s5 + $0x74] sm:$0xf]
  %v769 = vld [vmem:[%s5 + $0x78] sm:$0xf]
  %v770 = vld [vmem:[%s5 + $0x7c] sm:$0xf]
  %v803 = vunpack.c.l.b16 %v739
  %v804 = vunpack.c.l.b16 %v740
  %v805 = vunpack.c.l.b16 %v741
  %v806 = vunpack.c.l.b16 %v742
  %v807 = vunpack.c.l.b16 %v743
  %v808 = vunpack.c.l.b16 %v744
  %v809 = vunpack.c.l.b16 %v745
  %v810 = vunpack.c.l.b16 %v746
  %v811 = vunpack.c.l.b16 %v747
  %v812 = vunpack.c.l.b16 %v748
  %v813 = vunpack.c.l.b16 %v749
  %v814 = vunpack.c.l.b16 %v750
  %v815 = vunpack.c.l.b16 %v751
  %v816 = vunpack.c.l.b16 %v752
  %v817 = vunpack.c.l.b16 %v753
  %v818 = vunpack.c.l.b16 %v754
  %v819 = vunpack.c.l.b16 %v755
  %v820 = vunpack.c.l.b16 %v756
  %v821 = vunpack.c.l.b16 %v757
  %v822 = vunpack.c.l.b16 %v758
  %v823 = vunpack.c.l.b16 %v759
  %v824 = vunpack.c.l.b16 %v760
  %v825 = vunpack.c.l.b16 %v761
  %v826 = vunpack.c.l.b16 %v762
  %v827 = vunpack.c.l.b16 %v763
  %v828 = vunpack.c.l.b16 %v764
  %v829 = vunpack.c.l.b16 %v765
  %v830 = vunpack.c.l.b16 %v766
  %v831 = vunpack.c.l.b16 %v767
  %v832 = vunpack.c.l.b16 %v768
  %v833 = vunpack.c.l.b16 %v769
  %v834 = vunpack.c.l.b16 %v770
  %v835 = vpack.c.b16 %v804, %v803
  %v836 = vpack.c.b16 %v806, %v805
  %v837 = vpack.c.b16 %v808, %v807
  %v838 = vpack.c.b16 %v810, %v809
  %v839 = vpack.c.b16 %v812, %v811
  %v840 = vpack.c.b16 %v814, %v813
  %v841 = vpack.c.b16 %v816, %v815
  %v842 = vpack.c.b16 %v818, %v817
  %v843 = vpack.c.b16 %v820, %v819
  %v844 = vpack.c.b16 %v822, %v821
  %v845 = vpack.c.b16 %v824, %v823
  %v846 = vpack.c.b16 %v826, %v825
  %v847 = vpack.c.b16 %v828, %v827
  %v848 = vpack.c.b16 %v830, %v829
  %v849 = vpack.c.b16 %v832, %v831
  %v850 = vpack.c.b16 %v834, %v833
  %867 = vmatprep.subr.bf16.mxu0 0
  %868 = vmatpush1.bf16.msra.mxu0 %v835
  %869 = vmatprep.subr.bf16.mxu0 0
  %870 = vmatpush1.bf16.msra.mxu0 %v836
  %871 = vmatprep.subr.bf16.mxu0 0
  %872 = vmatpush1.bf16.msra.mxu0 %v837
  %873 = vmatprep.subr.bf16.mxu0 0
  %874 = vmatpush1.bf16.msra.mxu0 %v838
  %875 = vmatprep.subr.bf16.mxu0 0
  %876 = vmatpush1.bf16.msra.mxu0 %v839
  %877 = vmatprep.subr.bf16.mxu0 0
  %878 = vmatpush1.bf16.msra.mxu0 %v840
  %879 = vmatprep.subr.bf16.mxu0 0
  %880 = vmatpush1.bf16.msra.mxu0 %v841
  %881 = vmatprep.subr.bf16.mxu0 0
  %882 = vmatpush1.bf16.msra.mxu0 %v842
  %883 = vmatprep.subr.bf16.mxu0 0
  %884 = vmatpush1.bf16.msra.mxu0 %v843
  %885 = vmatprep.subr.bf16.mxu0 0
  %886 = vmatpush1.bf16.msra.mxu0 %v844
  %887 = vmatprep.subr.bf16.mxu0 0
  %888 = vmatpush1.bf16.msra.mxu0 %v845
  %889 = vmatprep.subr.bf16.mxu0 0
  %890 = vmatpush1.bf16.msra.mxu0 %v846
  %891 = vmatprep.subr.bf16.mxu0 0
  %892 = vmatpush1.bf16.msra.mxu0 %v847
  %893 = vmatprep.subr.bf16.mxu0 0
  %894 = vmatpush1.bf16.msra.mxu0 %v848
  %895 = vmatprep.subr.bf16.mxu0 0
  %896 = vmatpush1.bf16.msra.mxu0 %v849
  %897 = vmatprep.subr.bf16.mxu0 0
  %898 = vmatpush1.bf16.msra.mxu0 %v850
  %899 = vmatprep.mubr.bf16.mxu0 %v738
  %900 = vmatmul.mubr.bf16.gmra.mrb[0].mxu0 %v737
  %v901 = vpop.f32.mrb[0].mxu0
  %v902 = vadd.f32 %v37, %v901
  %v903 = vpop.f32.mrb[0].mxu0
  %v904 = vpop.f32.mrb[0].mxu0
  %v905 = vadd.f32 %v37, %v904
  %v906 = vpop.f32.mrb[0].mxu0
  %907 = vdwg.mxu0
  %v908 = vadd.f32 %v649, %v902
  %v909 = vadd.f32 %v650, %v905
  %v910 = vsel %vm59, %v908, 0.0
  %911 = vadd.xlane.f32.xlu0 %v910
  %v912 = vpop.xlane.xlu0 %911
  %v913 = vsel %vm59, %v909, 0.0
  %914 = vadd.xlane.f32.xlu0 %v913
  %v915 = vpop.xlane.xlu0 %914
  %v916 = vmul.f32 %v912, %v626
  %v917 = vmul.f32 %v915, %v626
  %v918 = vsub.f32 %v908, %v916
  %v919 = vsub.f32 %v909, %v917
  %v920 = vmul.f32 %v918, %v918
  %v921 = vmul.f32 %v919, %v919
  %v922 = vsel %vm59, %v920, 0.0
  %923 = vadd.xlane.f32.xlu0 %v922
  %v924 = vpop.xlane.xlu0 %923
  %v925 = vsel %vm59, %v921, 0.0
  %926 = vadd.xlane.f32.xlu0 %v925
  %v927 = vpop.xlane.xlu0 %926
  %v928 = vmul.f32 %v924, %v626
  %v929 = vmul.f32 %v927, %v626
  %v930 = vadd.f32 %v928, 1e-05
  %v931 = vadd.f32 %v929, 1e-05
  %v932 = vrsqrt.pop %v930
  %v933 = vrsqrt.pop %v931
  %v934 = vmul.f32 %v918, %v932
  %v935 = vmul.f32 %v919, %v933
  %v936 = vmul.f32 %v934, %v40
  %v937 = vmul.f32 %v935, %v40
  %v938 = vadd.f32 %v936, %v41
  %v939 = vadd.f32 %v937, %v41
  %v940 = vld [vmem:[%s6 + $0x10] ss:$0 sm:$0xff]
  %v941 = vld [vmem:[%s6 + $0x11] ss:$0 sm:$0xff]
  %s942 = scalar_lea.vmem %s6, 18
  %v943 = vld [vmem:[%s942] ss:$8 sm:$0x3]
  %v944 = vld [vmem:[%s6 + $0x13] ss:$0 sm:$0xff]
  %v945 = vld [vmem:[%s6 + $0x14] ss:$0 sm:$0xff]
  %v946 = vld [vmem:[%s6 + $0x15] ss:$0 sm:$0xff]
  %v947 = vld [vmem:[%s6 + $0x16] ss:$0 sm:$0xff]
  %v948 = vld [vmem:[%s6 + $0x17] ss:$0 sm:$0xff]
  %v949 = vpack.c.bf16 %v939, %v938
  %s950 = scalar_lea.vmem %s2, 16
  %v951 = vld [vmem:[%s950] sm:$0xf]
  %v952 = vld [vmem:[%s950 + $0x4] sm:$0xf]
  %v953 = vld [vmem:[%s950 + $0x8] sm:$0xf]
  %v954 = vld [vmem:[%s950 + $0xc] sm:$0xf]
  %v959 = vunpack.c.l.b16 %v951
  %v960 = vunpack.c.l.b16 %v952
  %v961 = vunpack.c.l.b16 %v953
  %v962 = vunpack.c.l.b16 %v954
  %v963 = vpack.c.b16 %v960, %v959
  %v964 = vpack.c.b16 %v962, %v961
  %v968 = vsel %vm59, %v949, 0
  %970 = vmatprep.subr.bf16.mxu0 0
  %971 = vmatpush1.bf16.msra.mxu0 %v963
  %972 = vmatprep.subr.bf16.mxu0 0
  %973 = vmatpush1.bf16.msra.mxu0 %v964
  %974 = vmatprep.subr.bf16.mxu0 0
  %975 = vmatpush1.bf16.msra.mxu0 0
  %976 = vmatprep.subr.bf16.mxu0 0
  %977 = vmatpush1.bf16.msra.mxu0 0
  %978 = vmatprep.subr.bf16.mxu0 0
  %979 = vmatpush1.bf16.msra.mxu0 0
  %980 = vmatprep.subr.bf16.mxu0 0
  %981 = vmatpush1.bf16.msra.mxu0 0
  %982 = vmatprep.subr.bf16.mxu0 0
  %983 = vmatpush1.bf16.msra.mxu0 0
  %984 = vmatprep.subr.bf16.mxu0 0
  %985 = vmatpush1.bf16.msra.mxu0 0
  %986 = vmatprep.subr.bf16.mxu0 0
  %987 = vmatpush1.bf16.msra.mxu0 0
  %988 = vmatprep.subr.bf16.mxu0 0
  %989 = vmatpush1.bf16.msra.mxu0 0
  %990 = vmatprep.subr.bf16.mxu0 0
  %991 = vmatpush1.bf16.msra.mxu0 0
  %992 = vmatprep.subr.bf16.mxu0 0
  %993 = vmatpush1.bf16.msra.mxu0 0
  %994 = vmatprep.subr.bf16.mxu0 0
  %995 = vmatpush1.bf16.msra.mxu0 0
  %996 = vmatprep.subr.bf16.mxu0 0
  %997 = vmatpush1.bf16.msra.mxu0 0
  %998 = vmatprep.subr.bf16.mxu0 0
  %999 = vmatpush1.bf16.msra.mxu0 0
  %1000 = vmatprep.subr.bf16.mxu0 0
  %1001 = vmatpush1.bf16.msra.mxu0 0
  %1002 = vmatprep.mubr.bf16.mxu0 0
  %1003 = vmatmul.mubr.bf16.gmra.mrb[0].mxu0 %v968
  %v1004 = vpop.f32.mrb[0].mxu0
  %v1005 = vadd.f32 %v940, %v1004
  %v1006 = vpop.f32.mrb[0].mxu0
  %v1007 = vpop.f32.mrb[0].mxu0
  %v1008 = vadd.f32 %v940, %v1007
  %v1009 = vpop.f32.mrb[0].mxu0
  %1010 = vdwg.mxu0
  %v1011 = vpack.c.bf16 %v1005, %v1005
  %v1012 = vpack.c.bf16 %v1008, %v1008
  %1014 = vrot.lane.b32.xlu0 %v1011, 96
  %v1015 = vpop.permute.xlu0 %1014
  %v1017 = vsel %vm109, %v1011, 0
  %v1020 = vsel %vm109, %v1015, 0
  %1022 = vmatprep.subr.bf16.mxu0 0
  %1023 = vmatpush1.bf16.xpose.msra.mxu0 %v1020
  %1024 = vmatprep.subr.bf16.mxu0 0
  %1025 = vmatpush1.bf16.xpose.msra.mxu0 0
  %1026 = vmatprep.subr.bf16.mxu0 0
  %1027 = vmatpush1.bf16.xpose.msra.mxu0 0
  %1028 = vmatprep.subr.bf16.mxu0 0
  %1029 = vmatpush1.bf16.xpose.msra.mxu0 0
  %1030 = vmatprep.subr.bf16.mxu0 0
  %1031 = vmatpush1.bf16.xpose.msra.mxu0 0
  %1032 = vmatprep.subr.bf16.mxu0 0
  %1033 = vmatpush1.bf16.xpose.msra.mxu0 0
  %1034 = vmatprep.subr.bf16.mxu0 0
  %1035 = vmatpush1.bf16.xpose.msra.mxu0 0
  %1036 = vmatprep.subr.bf16.mxu0 0
  %1037 = vmatpush1.bf16.xpose.msra.mxu0 0
  %1038 = vmatprep.subr.bf16.mxu0 0
  %1039 = vmatpush1.bf16.xpose.msra.mxu0 0
  %1040 = vmatprep.subr.bf16.mxu0 0
  %1041 = vmatpush1.bf16.xpose.msra.mxu0 0
  %1042 = vmatprep.subr.bf16.mxu0 0
  %1043 = vmatpush1.bf16.xpose.msra.mxu0 0
  %1044 = vmatprep.subr.bf16.mxu0 0
  %1045 = vmatpush1.bf16.xpose.msra.mxu0 0
  %1046 = vmatprep.subr.bf16.mxu0 0
  %1047 = vmatpush1.bf16.xpose.msra.mxu0 0
  %1048 = vmatprep.subr.bf16.mxu0 0
  %1049 = vmatpush1.bf16.xpose.msra.mxu0 0
  %1050 = vmatprep.subr.bf16.mxu0 0
  %1051 = vmatpush1.bf16.xpose.msra.mxu0 0
  %1052 = vmatprep.subr.bf16.mxu0 0
  %1053 = vmatpush1.bf16.xpose.msra.mxu0 0
  %1054 = vmatprep.mubr.bf16.mxu0 0
  %1055 = vmatmul.mubr.bf16.gmra.mrb[0].mxu0 %v1017
  %v1056 = vpop.f32.mrb[0].mxu0
  %v1057 = vadd.f32 %v32, %v1056
  %v1058 = vpop.f32.mrb[0].mxu0
  %v1059 = vpop.f32.mrb[0].mxu0
  %v1060 = vpop.f32.mrb[0].mxu0
  %1061 = vdwg.mxu0
  %1063 = vrot.lane.b32.xlu0 %v1012, 96
  %v1064 = vpop.permute.xlu0 %1063
  %v1066 = vsel %vm109, %v1012, 0
  %v1069 = vsel %vm109, %v1064, 0
  %1071 = vmatprep.subr.bf16.mxu0 0
  %1072 = vmatpush1.bf16.xpose.msra.mxu0 %v1069
  %1073 = vmatprep.subr.bf16.mxu0 0
  %1074 = vmatpush1.bf16.xpose.msra.mxu0 0
  %1075 = vmatprep.subr.bf16.mxu0 0
  %1076 = vmatpush1.bf16.xpose.msra.mxu0 0
  %1077 = vmatprep.subr.bf16.mxu0 0
  %1078 = vmatpush1.bf16.xpose.msra.mxu0 0
  %1079 = vmatprep.subr.bf16.mxu0 0
  %1080 = vmatpush1.bf16.xpose.msra.mxu0 0
  %1081 = vmatprep.subr.bf16.mxu0 0
  %1082 = vmatpush1.bf16.xpose.msra.mxu0 0
  %1083 = vmatprep.subr.bf16.mxu0 0
  %1084 = vmatpush1.bf16.xpose.msra.mxu0 0
  %1085 = vmatprep.subr.bf16.mxu0 0
  %1086 = vmatpush1.bf16.xpose.msra.mxu0 0
  %1087 = vmatprep.subr.bf16.mxu0 0
  %1088 = vmatpush1.bf16.xpose.msra.mxu0 0
  %1089 = vmatprep.subr.bf16.mxu0 0
  %1090 = vmatpush1.bf16.xpose.msra.mxu0 0
  %1091 = vmatprep.subr.bf16.mxu0 0
  %1092 = vmatpush1.bf16.xpose.msra.mxu0 0
  %1093 = vmatprep.subr.bf16.mxu0 0
  %1094 = vmatpush1.bf16.xpose.msra.mxu0 0
  %1095 = vmatprep.subr.bf16.mxu0 0
  %1096 = vmatpush1.bf16.xpose.msra.mxu0 0
  %1097 = vmatprep.subr.bf16.mxu0 0
  %1098 = vmatpush1.bf16.xpose.msra.mxu0 0
  %1099 = vmatprep.subr.bf16.mxu0 0
  %1100 = vmatpush1.bf16.xpose.msra.mxu0 0
  %1101 = vmatprep.subr.bf16.mxu0 0
  %1102 = vmatpush1.bf16.xpose.msra.mxu0 0
  %1103 = vmatprep.mubr.bf16.mxu0 0
  %1104 = vmatmul.mubr.bf16.gmra.mrb[0].mxu0 %v1066
  %v1105 = vpop.f32.mrb[0].mxu0
  %v1106 = vadd.f32 %v32, %v1105
  %v1107 = vpop.f32.mrb[0].mxu0
  %v1108 = vpop.f32.mrb[0].mxu0
  %v1109 = vpop.f32.mrb[0].mxu0
  %1110 = vdwg.mxu0
  %v1111 = vsel %vm205, %v1057, -inf
  %1112 = vmax.xlane.f32.xlu0 %v1111
  %v1113 = vpop.xlane.xlu0 %1112
  %v1114 = vsel %vm205, %v1106, -inf
  %1115 = vmax.xlane.f32.xlu0 %v1114
  %v1116 = vpop.xlane.xlu0 %1115
  %v1117 = vsub.f32 %v1057, %v1113
  %v1118 = vsub.f32 %v1106, %v1116
  %v1119 = vmul.f32 %v1117, 1.442695
  %v1120 = vpow.pop %v1119
  %v1121 = vmul.f32 %v1118, 1.442695
  %v1122 = vpow.pop %v1121
  %v1123 = vsel %vm205, %v1120, 0.0
  %1124 = vadd.xlane.f32.xlu0 %v1123
  %v1125 = vpop.xlane.xlu0 %1124
  %v1126 = vsel %vm205, %v1122, 0.0
  %1127 = vadd.xlane.f32.xlu0 %v1126
  %v1128 = vpop.xlane.xlu0 %1127
  %v1129 = vrcp.pop %v1125
  %v1130 = vmul.f32 %v1120, %v1129
  %v1131 = vrcp.pop %v1128
  %v1132 = vmul.f32 %v1122, %v1131
  %v1133 = vpack.c.bf16 %v1130, %v1130
  %v1134 = vpack.c.bf16 %v1132, %v1132
  %1135 = vrot.lane.b32.xlu0 %v1011, 64
  %v1136 = vpop.permute.xlu0 %1135
  %v1138 = vsel %vm205, %v1133, 0
  %v1141 = vsel %vm235, %v1136, 0
  %1143 = vmatprep.subr.bf16.mxu0 0
  %1144 = vmatpush1.bf16.msra.mxu0 %v1141
  %1145 = vmatprep.subr.bf16.mxu0 0
  %1146 = vmatpush1.bf16.msra.mxu0 0
  %1147 = vmatprep.subr.bf16.mxu0 0
  %1148 = vmatpush1.bf16.msra.mxu0 0
  %1149 = vmatprep.subr.bf16.mxu0 0
  %1150 = vmatpush1.bf16.msra.mxu0 0
  %1151 = vmatprep.subr.bf16.mxu0 0
  %1152 = vmatpush1.bf16.msra.mxu0 0
  %1153 = vmatprep.subr.bf16.mxu0 0
  %1154 = vmatpush1.bf16.msra.mxu0 0
  %1155 = vmatprep.subr.bf16.mxu0 0
  %1156 = vmatpush1.bf16.msra.mxu0 0
  %1157 = vmatprep.subr.bf16.mxu0 0
  %1158 = vmatpush1.bf16.msra.mxu0 0
  %1159 = vmatprep.subr.bf16.mxu0 0
  %1160 = vmatpush1.bf16.msra.mxu0 0
  %1161 = vmatprep.subr.bf16.mxu0 0
  %1162 = vmatpush1.bf16.msra.mxu0 0
  %1163 = vmatprep.subr.bf16.mxu0 0
  %1164 = vmatpush1.bf16.msra.mxu0 0
  %1165 = vmatprep.subr.bf16.mxu0 0
  %1166 = vmatpush1.bf16.msra.mxu0 0
  %1167 = vmatprep.subr.bf16.mxu0 0
  %1168 = vmatpush1.bf16.msra.mxu0 0
  %1169 = vmatprep.subr.bf16.mxu0 0
  %1170 = vmatpush1.bf16.msra.mxu0 0
  %1171 = vmatprep.subr.bf16.mxu0 0
  %1172 = vmatpush1.bf16.msra.mxu0 0
  %1173 = vmatprep.subr.bf16.mxu0 0
  %1174 = vmatpush1.bf16.msra.mxu0 0
  %1175 = vmatprep.mubr.bf16.mxu0 0
  %1176 = vmatmul.mubr.bf16.gmra.mrb[0].mxu0 %v1138
  %v1177 = vpop.f32.mrb[0].mxu0
  %v1178 = vadd.f32 0.0, %v1177
  %v1179 = vpop.f32.mrb[0].mxu0
  %v1180 = vpop.f32.mrb[0].mxu0
  %v1181 = vpop.f32.mrb[0].mxu0
  %1182 = vdwg.mxu0
  %1183 = vrot.lane.b32.xlu0 %v1012, 64
  %v1184 = vpop.permute.xlu0 %1183
  %v1186 = vsel %vm205, %v1134, 0
  %v1189 = vsel %vm235, %v1184, 0
  %1191 = vmatprep.subr.bf16.mxu0 0
  %1192 = vmatpush1.bf16.msra.mxu0 %v1189
  %1193 = vmatprep.subr.bf16.mxu0 0
  %1194 = vmatpush1.bf16.msra.mxu0 0
  %1195 = vmatprep.subr.bf16.mxu0 0
  %1196 = vmatpush1.bf16.msra.mxu0 0
  %1197 = vmatprep.subr.bf16.mxu0 0
  %1198 = vmatpush1.bf16.msra.mxu0 0
  %1199 = vmatprep.subr.bf16.mxu0 0
  %1200 = vmatpush1.bf16.msra.mxu0 0
  %1201 = vmatprep.subr.bf16.mxu0 0
  %1202 = vmatpush1.bf16.msra.mxu0 0
  %1203 = vmatprep.subr.bf16.mxu0 0
  %1204 = vmatpush1.bf16.msra.mxu0 0
  %1205 = vmatprep.subr.bf16.mxu0 0
  %1206 = vmatpush1.bf16.msra.mxu0 0
  %1207 = vmatprep.subr.bf16.mxu0 0
  %1208 = vmatpush1.bf16.msra.mxu0 0
  %1209 = vmatprep.subr.bf16.mxu0 0
  %1210 = vmatpush1.bf16.msra.mxu0 0
  %1211 = vmatprep.subr.bf16.mxu0 0
  %1212 = vmatpush1.bf16.msra.mxu0 0
  %1213 = vmatprep.subr.bf16.mxu0 0
  %1214 = vmatpush1.bf16.msra.mxu0 0
  %1215 = vmatprep.subr.bf16.mxu0 0
  %1216 = vmatpush1.bf16.msra.mxu0 0
  %1217 = vmatprep.subr.bf16.mxu0 0
  %1218 = vmatpush1.bf16.msra.mxu0 0
  %1219 = vmatprep.subr.bf16.mxu0 0
  %1220 = vmatpush1.bf16.msra.mxu0 0
  %1221 = vmatprep.subr.bf16.mxu0 0
  %1222 = vmatpush1.bf16.msra.mxu0 0
  %1223 = vmatprep.mubr.bf16.mxu0 0
  %1224 = vmatmul.mubr.bf16.gmra.mrb[0].mxu0 %v1186
  %v1225 = vpop.f32.mrb[0].mxu0
  %v1226 = vadd.f32 0.0, %v1225
  %v1227 = vpop.f32.mrb[0].mxu0
  %v1228 = vpop.f32.mrb[0].mxu0
  %v1229 = vpop.f32.mrb[0].mxu0
  %1230 = vdwg.mxu0
  %1231 = vrot.lane.b32.xlu0 %v1011, 112
  %v1232 = vpop.permute.xlu0 %1231
  %1233 = vrot.lane.b32.xlu0 %v1011, 80
  %v1234 = vpop.permute.xlu0 %1233
  %v1236 = vsel %vm109, %v1232, 0
  %v1239 = vsel %vm109, %v1234, 0
  %1241 = vmatprep.subr.bf16.mxu0 0
  %1242 = vmatpush1.bf16.xpose.msra.mxu0 %v1239
  %1243 = vmatprep.subr.bf16.mxu0 0
  %1244 = vmatpush1.bf16.xpose.msra.mxu0 0
  %1245 = vmatprep.subr.bf16.mxu0 0
  %1246 = vmatpush1.bf16.xpose.msra.mxu0 0
  %1247 = vmatprep.subr.bf16.mxu0 0
  %1248 = vmatpush1.bf16.xpose.msra.mxu0 0
  %1249 = vmatprep.subr.bf16.mxu0 0
  %1250 = vmatpush1.bf16.xpose.msra.mxu0 0
  %1251 = vmatprep.subr.bf16.mxu0 0
  %1252 = vmatpush1.bf16.xpose.msra.mxu0 0
  %1253 = vmatprep.subr.bf16.mxu0 0
  %1254 = vmatpush1.bf16.xpose.msra.mxu0 0
  %1255 = vmatprep.subr.bf16.mxu0 0
  %1256 = vmatpush1.bf16.xpose.msra.mxu0 0
  %1257 = vmatprep.subr.bf16.mxu0 0
  %1258 = vmatpush1.bf16.xpose.msra.mxu0 0
  %1259 = vmatprep.subr.bf16.mxu0 0
  %1260 = vmatpush1.bf16.xpose.msra.mxu0 0
  %1261 = vmatprep.subr.bf16.mxu0 0
  %1262 = vmatpush1.bf16.xpose.msra.mxu0 0
  %1263 = vmatprep.subr.bf16.mxu0 0
  %1264 = vmatpush1.bf16.xpose.msra.mxu0 0
  %1265 = vmatprep.subr.bf16.mxu0 0
  %1266 = vmatpush1.bf16.xpose.msra.mxu0 0
  %1267 = vmatprep.subr.bf16.mxu0 0
  %1268 = vmatpush1.bf16.xpose.msra.mxu0 0
  %1269 = vmatprep.subr.bf16.mxu0 0
  %1270 = vmatpush1.bf16.xpose.msra.mxu0 0
  %1271 = vmatprep.subr.bf16.mxu0 0
  %1272 = vmatpush1.bf16.xpose.msra.mxu0 0
  %1273 = vmatprep.mubr.bf16.mxu0 0
  %1274 = vmatmul.mubr.bf16.gmra.mrb[0].mxu0 %v1236
  %v1275 = vpop.f32.mrb[0].mxu0
  %v1276 = vadd.f32 %v32, %v1275
  %v1277 = vpop.f32.mrb[0].mxu0
  %v1278 = vpop.f32.mrb[0].mxu0
  %v1279 = vpop.f32.mrb[0].mxu0
  %1280 = vdwg.mxu0
  %1281 = vrot.lane.b32.xlu0 %v1012, 112
  %v1282 = vpop.permute.xlu0 %1281
  %1283 = vrot.lane.b32.xlu0 %v1012, 80
  %v1284 = vpop.permute.xlu0 %1283
  %v1286 = vsel %vm109, %v1282, 0
  %v1289 = vsel %vm109, %v1284, 0
  %1291 = vmatprep.subr.bf16.mxu0 0
  %1292 = vmatpush1.bf16.xpose.msra.mxu0 %v1289
  %1293 = vmatprep.subr.bf16.mxu0 0
  %1294 = vmatpush1.bf16.xpose.msra.mxu0 0
  %1295 = vmatprep.subr.bf16.mxu0 0
  %1296 = vmatpush1.bf16.xpose.msra.mxu0 0
  %1297 = vmatprep.subr.bf16.mxu0 0
  %1298 = vmatpush1.bf16.xpose.msra.mxu0 0
  %1299 = vmatprep.subr.bf16.mxu0 0
  %1300 = vmatpush1.bf16.xpose.msra.mxu0 0
  %1301 = vmatprep.subr.bf16.mxu0 0
  %1302 = vmatpush1.bf16.xpose.msra.mxu0 0
  %1303 = vmatprep.subr.bf16.mxu0 0
  %1304 = vmatpush1.bf16.xpose.msra.mxu0 0
  %1305 = vmatprep.subr.bf16.mxu0 0
  %1306 = vmatpush1.bf16.xpose.msra.mxu0 0
  %1307 = vmatprep.subr.bf16.mxu0 0
  %1308 = vmatpush1.bf16.xpose.msra.mxu0 0
  %1309 = vmatprep.subr.bf16.mxu0 0
  %1310 = vmatpush1.bf16.xpose.msra.mxu0 0
  %1311 = vmatprep.subr.bf16.mxu0 0
  %1312 = vmatpush1.bf16.xpose.msra.mxu0 0
  %1313 = vmatprep.subr.bf16.mxu0 0
  %1314 = vmatpush1.bf16.xpose.msra.mxu0 0
  %1315 = vmatprep.subr.bf16.mxu0 0
  %1316 = vmatpush1.bf16.xpose.msra.mxu0 0
  %1317 = vmatprep.subr.bf16.mxu0 0
  %1318 = vmatpush1.bf16.xpose.msra.mxu0 0
  %1319 = vmatprep.subr.bf16.mxu0 0
  %1320 = vmatpush1.bf16.xpose.msra.mxu0 0
  %1321 = vmatprep.subr.bf16.mxu0 0
  %1322 = vmatpush1.bf16.xpose.msra.mxu0 0
  %1323 = vmatprep.mubr.bf16.mxu0 0
  %1324 = vmatmul.mubr.bf16.gmra.mrb[0].mxu0 %v1286
  %v1325 = vpop.f32.mrb[0].mxu0
  %v1326 = vadd.f32 %v32, %v1325
  %v1327 = vpop.f32.mrb[0].mxu0
  %v1328 = vpop.f32.mrb[0].mxu0
  %v1329 = vpop.f32.mrb[0].mxu0
  %1330 = vdwg.mxu0
  %v1331 = vsel %vm205, %v1276, -inf
  %1332 = vmax.xlane.f32.xlu0 %v1331
  %v1333 = vpop.xlane.xlu0 %1332
  %v1334 = vsel %vm205, %v1326, -inf
  %1335 = vmax.xlane.f32.xlu0 %v1334
  %v1336 = vpop.xlane.xlu0 %1335
  %v1337 = vsub.f32 %v1276, %v1333
  %v1338 = vsub.f32 %v1326, %v1336
  %v1339 = vmul.f32 %v1337, 1.442695
  %v1340 = vpow.pop %v1339
  %v1341 = vmul.f32 %v1338, 1.442695
  %v1342 = vpow.pop %v1341
  %v1343 = vsel %vm205, %v1340, 0.0
  %1344 = vadd.xlane.f32.xlu0 %v1343
  %v1345 = vpop.xlane.xlu0 %1344
  %v1346 = vsel %vm205, %v1342, 0.0
  %1347 = vadd.xlane.f32.xlu0 %v1346
  %v1348 = vpop.xlane.xlu0 %1347
  %v1349 = vrcp.pop %v1345
  %v1350 = vmul.f32 %v1340, %v1349
  %v1351 = vrcp.pop %v1348
  %v1352 = vmul.f32 %v1342, %v1351
  %v1353 = vpack.c.bf16 %v1350, %v1350
  %v1354 = vpack.c.bf16 %v1352, %v1352
  %1355 = vrot.lane.b32.xlu0 %v1011, 48
  %v1356 = vpop.permute.xlu0 %1355
  %v1358 = vsel %vm205, %v1353, 0
  %v1361 = vsel %vm235, %v1356, 0
  %1363 = vmatprep.subr.bf16.mxu0 0
  %1364 = vmatpush1.bf16.msra.mxu0 %v1361
  %1365 = vmatprep.subr.bf16.mxu0 0
  %1366 = vmatpush1.bf16.msra.mxu0 0
  %1367 = vmatprep.subr.bf16.mxu0 0
  %1368 = vmatpush1.bf16.msra.mxu0 0
  %1369 = vmatprep.subr.bf16.mxu0 0
  %1370 = vmatpush1.bf16.msra.mxu0 0
  %1371 = vmatprep.subr.bf16.mxu0 0
  %1372 = vmatpush1.bf16.msra.mxu0 0
  %1373 = vmatprep.subr.bf16.mxu0 0
  %1374 = vmatpush1.bf16.msra.mxu0 0
  %1375 = vmatprep.subr.bf16.mxu0 0
  %1376 = vmatpush1.bf16.msra.mxu0 0
  %1377 = vmatprep.subr.bf16.mxu0 0
  %1378 = vmatpush1.bf16.msra.mxu0 0
  %1379 = vmatprep.subr.bf16.mxu0 0
  %1380 = vmatpush1.bf16.msra.mxu0 0
  %1381 = vmatprep.subr.bf16.mxu0 0
  %1382 = vmatpush1.bf16.msra.mxu0 0
  %1383 = vmatprep.subr.bf16.mxu0 0
  %1384 = vmatpush1.bf16.msra.mxu0 0
  %1385 = vmatprep.subr.bf16.mxu0 0
  %1386 = vmatpush1.bf16.msra.mxu0 0
  %1387 = vmatprep.subr.bf16.mxu0 0
  %1388 = vmatpush1.bf16.msra.mxu0 0
  %1389 = vmatprep.subr.bf16.mxu0 0
  %1390 = vmatpush1.bf16.msra.mxu0 0
  %1391 = vmatprep.subr.bf16.mxu0 0
  %1392 = vmatpush1.bf16.msra.mxu0 0
  %1393 = vmatprep.subr.bf16.mxu0 0
  %1394 = vmatpush1.bf16.msra.mxu0 0
  %1395 = vmatprep.mubr.bf16.mxu0 0
  %1396 = vmatmul.mubr.bf16.gmra.mrb[0].mxu0 %v1358
  %v1397 = vpop.f32.mrb[0].mxu0
  %v1398 = vadd.f32 0.0, %v1397
  %v1399 = vpop.f32.mrb[0].mxu0
  %v1400 = vpop.f32.mrb[0].mxu0
  %v1401 = vpop.f32.mrb[0].mxu0
  %1402 = vdwg.mxu0
  %1403 = vrot.lane.b32.xlu0 %v1012, 48
  %v1404 = vpop.permute.xlu0 %1403
  %v1406 = vsel %vm205, %v1354, 0
  %v1409 = vsel %vm235, %v1404, 0
  %1411 = vmatprep.subr.bf16.mxu0 0
  %1412 = vmatpush1.bf16.msra.mxu0 %v1409
  %1413 = vmatprep.subr.bf16.mxu0 0
  %1414 = vmatpush1.bf16.msra.mxu0 0
  %1415 = vmatprep.subr.bf16.mxu0 0
  %1416 = vmatpush1.bf16.msra.mxu0 0
  %1417 = vmatprep.subr.bf16.mxu0 0
  %1418 = vmatpush1.bf16.msra.mxu0 0
  %1419 = vmatprep.subr.bf16.mxu0 0
  %1420 = vmatpush1.bf16.msra.mxu0 0
  %1421 = vmatprep.subr.bf16.mxu0 0
  %1422 = vmatpush1.bf16.msra.mxu0 0
  %1423 = vmatprep.subr.bf16.mxu0 0
  %1424 = vmatpush1.bf16.msra.mxu0 0
  %1425 = vmatprep.subr.bf16.mxu0 0
  %1426 = vmatpush1.bf16.msra.mxu0 0
  %1427 = vmatprep.subr.bf16.mxu0 0
  %1428 = vmatpush1.bf16.msra.mxu0 0
  %1429 = vmatprep.subr.bf16.mxu0 0
  %1430 = vmatpush1.bf16.msra.mxu0 0
  %1431 = vmatprep.subr.bf16.mxu0 0
  %1432 = vmatpush1.bf16.msra.mxu0 0
  %1433 = vmatprep.subr.bf16.mxu0 0
  %1434 = vmatpush1.bf16.msra.mxu0 0
  %1435 = vmatprep.subr.bf16.mxu0 0
  %1436 = vmatpush1.bf16.msra.mxu0 0
  %1437 = vmatprep.subr.bf16.mxu0 0
  %1438 = vmatpush1.bf16.msra.mxu0 0
  %1439 = vmatprep.subr.bf16.mxu0 0
  %1440 = vmatpush1.bf16.msra.mxu0 0
  %1441 = vmatprep.subr.bf16.mxu0 0
  %1442 = vmatpush1.bf16.msra.mxu0 0
  %1443 = vmatprep.mubr.bf16.mxu0 0
  %1444 = vmatmul.mubr.bf16.gmra.mrb[0].mxu0 %v1406
  %v1445 = vpop.f32.mrb[0].mxu0
  %v1446 = vadd.f32 0.0, %v1445
  %v1447 = vpop.f32.mrb[0].mxu0
  %v1448 = vpop.f32.mrb[0].mxu0
  %v1449 = vpop.f32.mrb[0].mxu0
  %1450 = vdwg.mxu0
  %1453 = vrot.lane.b32.xlu0 %v1398, 16
  %v1454 = vpop.permute.xlu0 %1453
  %1455 = vrot.lane.b32.xlu0 %v1446, 16
  %v1456 = vpop.permute.xlu0 %1455
  %v1459 = vsel %vm109, %v1178, %v1454
  %v1460 = vsel %vm109, %v1226, %v1456
  %v1461 = vpack.c.bf16 %v1460, %v1459
  %s1462 = scalar_lea.vmem %s3, 16
  %v1463 = vld [vmem:[%s1462] sm:$0xf]
  %v1464 = vld [vmem:[%s1462 + $0x4] sm:$0xf]
  %v1465 = vld [vmem:[%s1462 + $0x8] sm:$0xf]
  %v1466 = vld [vmem:[%s1462 + $0xc] sm:$0xf]
  %v1471 = vunpack.c.l.b16 %v1463
  %v1472 = vunpack.c.l.b16 %v1464
  %v1473 = vunpack.c.l.b16 %v1465
  %v1474 = vunpack.c.l.b16 %v1466
  %v1475 = vpack.c.b16 %v1472, %v1471
  %v1476 = vpack.c.b16 %v1474, %v1473
  %v1480 = vsel %vm59, %v1461, 0
  %1482 = vmatprep.subr.bf16.mxu0 0
  %1483 = vmatpush1.bf16.msra.mxu0 %v1475
  %1484 = vmatprep.subr.bf16.mxu0 0
  %1485 = vmatpush1.bf16.msra.mxu0 %v1476
  %1486 = vmatprep.subr.bf16.mxu0 0
  %1487 = vmatpush1.bf16.msra.mxu0 0
  %1488 = vmatprep.subr.bf16.mxu0 0
  %1489 = vmatpush1.bf16.msra.mxu0 0
  %1490 = vmatprep.subr.bf16.mxu0 0
  %1491 = vmatpush1.bf16.msra.mxu0 0
  %1492 = vmatprep.subr.bf16.mxu0 0
  %1493 = vmatpush1.bf16.msra.mxu0 0
  %1494 = vmatprep.subr.bf16.mxu0 0
  %1495 = vmatpush1.bf16.msra.mxu0 0
  %1496 = vmatprep.subr.bf16.mxu0 0
  %1497 = vmatpush1.bf16.msra.mxu0 0
  %1498 = vmatprep.subr.bf16.mxu0 0
  %1499 = vmatpush1.bf16.msra.mxu0 0
  %1500 = vmatprep.subr.bf16.mxu0 0
  %1501 = vmatpush1.bf16.msra.mxu0 0
  %1502 = vmatprep.subr.bf16.mxu0 0
  %1503 = vmatpush1.bf16.msra.mxu0 0
  %1504 = vmatprep.subr.bf16.mxu0 0
  %1505 = vmatpush1.bf16.msra.mxu0 0
  %1506 = vmatprep.subr.bf16.mxu0 0
  %1507 = vmatpush1.bf16.msra.mxu0 0
  %1508 = vmatprep.subr.bf16.mxu0 0
  %1509 = vmatpush1.bf16.msra.mxu0 0
  %1510 = vmatprep.subr.bf16.mxu0 0
  %1511 = vmatpush1.bf16.msra.mxu0 0
  %1512 = vmatprep.subr.bf16.mxu0 0
  %1513 = vmatpush1.bf16.msra.mxu0 0
  %1514 = vmatprep.mubr.bf16.mxu0 0
  %1515 = vmatmul.mubr.bf16.gmra.mrb[0].mxu0 %v1480
  %v1516 = vpop.f32.mrb[0].mxu0
  %v1517 = vadd.f32 %v941, %v1516
  %v1518 = vpop.f32.mrb[0].mxu0
  %v1519 = vpop.f32.mrb[0].mxu0
  %v1520 = vadd.f32 %v941, %v1519
  %v1521 = vpop.f32.mrb[0].mxu0
  %1522 = vdwg.mxu0
  %v1523 = vadd.f32 %v938, %v1517
  %v1524 = vadd.f32 %v939, %v1520
  %v1525 = vsel %vm59, %v1523, 0.0
  %1526 = vadd.xlane.f32.xlu0 %v1525
  %v1527 = vpop.xlane.xlu0 %1526
  %v1528 = vsel %vm59, %v1524, 0.0
  %1529 = vadd.xlane.f32.xlu0 %v1528
  %v1530 = vpop.xlane.xlu0 %1529
  %v1531 = vmul.f32 %v1527, %v626
  %v1532 = vmul.f32 %v1530, %v626
  %v1533 = vsub.f32 %v1523, %v1531
  %v1534 = vsub.f32 %v1524, %v1532
  %v1535 = vmul.f32 %v1533, %v1533
  %v1536 = vmul.f32 %v1534, %v1534
  %v1537 = vsel %vm59, %v1535, 0.0
  %1538 = vadd.xlane.f32.xlu0 %v1537
  %v1539 = vpop.xlane.xlu0 %1538
  %v1540 = vsel %vm59, %v1536, 0.0
  %1541 = vadd.xlane.f32.xlu0 %v1540
  %v1542 = vpop.xlane.xlu0 %1541
  %v1543 = vmul.f32 %v1539, %v626
  %v1544 = vmul.f32 %v1542, %v626
  %v1545 = vadd.f32 %v1543, 1e-05
  %v1546 = vadd.f32 %v1544, 1e-05
  %v1547 = vrsqrt.pop %v1545
  %v1548 = vrsqrt.pop %v1546
  %v1549 = vmul.f32 %v1533, %v1547
  %v1550 = vmul.f32 %v1534, %v1548
  %v1551 = vmul.f32 %v1549, %v945
  %v1552 = vmul.f32 %v1550, %v945
  %v1553 = vadd.f32 %v1551, %v946
  %v1554 = vadd.f32 %v1552, %v946
  %v1555 = vpack.c.bf16 %v1554, %v1553
  %s1556 = scalar_lea.vmem %s4, 32
  %v1557 = vld [vmem:[%s1556] sm:$0xff]
  %v1558 = vld [vmem:[%s1556 + $0x8] sm:$0xff]
  %v1559 = vld [vmem:[%s1556 + $0x10] sm:$0xff]
  %v1560 = vld [vmem:[%s1556 + $0x18] sm:$0xff]
  %v1562 = vlaneseq
  %v1563 = vshrl.u32 %v1562, 7
  %v1564 = vsub.s32 0, %v1563
  %v1565 = vrot.slane %v943, %v1564
  %v1566 = vlaneseq
  %v1567 = vshrl.u32 %v1566, 7
  %v1568 = vsub.s32 1, %v1567
  %v1569 = vrot.slane %v943, %v1568
  %v1576 = vunpack.c.l.b16 %v1557
  %v1577 = vunpack.c.h.b16 %v1557
  %v1578 = vunpack.c.l.b16 %v1558
  %v1579 = vunpack.c.h.b16 %v1558
  %v1580 = vunpack.c.l.b16 %v1559
  %v1581 = vunpack.c.h.b16 %v1559
  %v1582 = vunpack.c.l.b16 %v1560
  %v1583 = vunpack.c.h.b16 %v1560
  %v1584 = vpack.c.b16 %v1578, %v1576
  %v1585 = vpack.c.b16 %v1579, %v1577
  %v1586 = vpack.c.b16 %v1582, %v1580
  %v1587 = vpack.c.b16 %v1583, %v1581
  %v1593 = vsel %vm59, %v1555, 0
  %1595 = vmatprep.subr.bf16.mxu0 %v1585
  %1596 = vmatpush1.bf16.msra.mxu0 %v1584
  %1597 = vmatprep.subr.bf16.mxu0 %v1587
  %1598 = vmatpush1.bf16.msra.mxu0 %v1586
  %1599 = vmatprep.subr.bf16.mxu0 0
  %1600 = vmatpush1.bf16.msra.mxu0 0
  %1601 = vmatprep.subr.bf16.mxu0 0
  %1602 = vmatpush1.bf16.msra.mxu0 0
  %1603 = vmatprep.subr.bf16.mxu0 0
  %1604 = vmatpush1.bf16.msra.mxu0 0
  %1605 = vmatprep.subr.bf16.mxu0 0
  %1606 = vmatpush1.bf16.msra.mxu0 0
  %1607 = vmatprep.subr.bf16.mxu0 0
  %1608 = vmatpush1.bf16.msra.mxu0 0
  %1609 = vmatprep.subr.bf16.mxu0 0
  %1610 = vmatpush1.bf16.msra.mxu0 0
  %1611 = vmatprep.subr.bf16.mxu0 0
  %1612 = vmatpush1.bf16.msra.mxu0 0
  %1613 = vmatprep.subr.bf16.mxu0 0
  %1614 = vmatpush1.bf16.msra.mxu0 0
  %1615 = vmatprep.subr.bf16.mxu0 0
  %1616 = vmatpush1.bf16.msra.mxu0 0
  %1617 = vmatprep.subr.bf16.mxu0 0
  %1618 = vmatpush1.bf16.msra.mxu0 0
  %1619 = vmatprep.subr.bf16.mxu0 0
  %1620 = vmatpush1.bf16.msra.mxu0 0
  %1621 = vmatprep.subr.bf16.mxu0 0
  %1622 = vmatpush1.bf16.msra.mxu0 0
  %1623 = vmatprep.subr.bf16.mxu0 0
  %1624 = vmatpush1.bf16.msra.mxu0 0
  %1625 = vmatprep.subr.bf16.mxu0 0
  %1626 = vmatpush1.bf16.msra.mxu0 0
  %1627 = vmatprep.mubr.bf16.mxu0 0
  %1628 = vmatmul.mubr.bf16.gmra.mrb[0].mxu0 %v1593
  %v1629 = vpop.f32.mrb[0].mxu0
  %v1630 = vadd.f32 %v1565, %v1629
  %v1631 = vpop.f32.mrb[0].mxu0
  %v1632 = vadd.f32 %v1569, %v1631
  %v1633 = vpop.f32.mrb[0].mxu0
  %v1634 = vadd.f32 %v1565, %v1633
  %v1635 = vpop.f32.mrb[0].mxu0
  %v1636 = vadd.f32 %v1569, %v1635
  %1637 = vdwg.mxu0
  %v1638 = vmax.f32 %v1630, 0.0
  %v1639 = vmax.f32 %v1632, 0.0
  %v1640 = vmax.f32 %v1634, 0.0
  %v1641 = vmax.f32 %v1636, 0.0
  %v1642 = vpack.c.bf16 %v1640, %v1638
  %v1643 = vpack.c.bf16 %v1641, %v1639
  %s1644 = scalar_lea.vmem %s5, 128
  %v1645 = vld [vmem:[%s1644] sm:$0xf]
  %v1646 = vld [vmem:[%s1644 + $0x4] sm:$0xf]
  %v1647 = vld [vmem:[%s1644 + $0x8] sm:$0xf]
  %v1648 = vld [vmem:[%s1644 + $0xc] sm:$0xf]
  %v1649 = vld [vmem:[%s1644 + $0x10] sm:$0xf]
  %v1650 = vld [vmem:[%s1644 + $0x14] sm:$0xf]
  %v1651 = vld [vmem:[%s1644 + $0x18] sm:$0xf]
  %v1652 = vld [vmem:[%s1644 + $0x1c] sm:$0xf]
  %v1653 = vld [vmem:[%s1644 + $0x20] sm:$0xf]
  %v1654 = vld [vmem:[%s1644 + $0x24] sm:$0xf]
  %v1655 = vld [vmem:[%s1644 + $0x28] sm:$0xf]
  %v1656 = vld [vmem:[%s1644 + $0x2c] sm:$0xf]
  %v1657 = vld [vmem:[%s1644 + $0x30] sm:$0xf]
  %v1658 = vld [vmem:[%s1644 + $0x34] sm:$0xf]
  %v1659 = vld [vmem:[%s1644 + $0x38] sm:$0xf]
  %v1660 = vld [vmem:[%s1644 + $0x3c] sm:$0xf]
  %v1661 = vld [vmem:[%s1644 + $0x40] sm:$0xf]
  %v1662 = vld [vmem:[%s1644 + $0x44] sm:$0xf]
  %v1663 = vld [vmem:[%s1644 + $0x48] sm:$0xf]
  %v1664 = vld [vmem:[%s1644 + $0x4c] sm:$0xf]
  %v1665 = vld [vmem:[%s1644 + $0x50] sm:$0xf]
  %v1666 = vld [vmem:[%s1644 + $0x54] sm:$0xf]
  %v1667 = vld [vmem:[%s1644 + $0x58] sm:$0xf]
  %v1668 = vld [vmem:[%s1644 + $0x5c] sm:$0xf]
  %v1669 = vld [vmem:[%s1644 + $0x60] sm:$0xf]
  %v1670 = vld [vmem:[%s1644 + $0x64] sm:$0xf]
  %v1671 = vld [vmem:[%s1644 + $0x68] sm:$0xf]
  %v1672 = vld [vmem:[%s1644 + $0x6c] sm:$0xf]
  %v1673 = vld [vmem:[%s1644 + $0x70] sm:$0xf]
  %v1674 = vld [vmem:[%s1644 + $0x74] sm:$0xf]
  %v1675 = vld [vmem:[%s1644 + $0x78] sm:$0xf]
  %v1676 = vld [vmem:[%s1644 + $0x7c] sm:$0xf]
  %v1709 = vunpack.c.l.b16 %v1645
  %v1710 = vunpack.c.l.b16 %v1646
  %v1711 = vunpack.c.l.b16 %v1647
  %v1712 = vunpack.c.l.b16 %v1648
  %v1713 = vunpack.c.l.b16 %v1649
  %v1714 = vunpack.c.l.b16 %v1650
  %v1715 = vunpack.c.l.b16 %v1651
  %v1716 = vunpack.c.l.b16 %v1652
  %v1717 = vunpack.c.l.b16 %v1653
  %v1718 = vunpack.c.l.b16 %v1654
  %v1719 = vunpack.c.l.b16 %v1655
  %v1720 = vunpack.c.l.b16 %v1656
  %v1721 = vunpack.c.l.b16 %v1657
  %v1722 = vunpack.c.l.b16 %v1658
  %v1723 = vunpack.c.l.b16 %v1659
  %v1724 = vunpack.c.l.b16 %v1660
  %v1725 = vunpack.c.l.b16 %v1661
  %v1726 = vunpack.c.l.b16 %v1662
  %v1727 = vunpack.c.l.b16 %v1663
  %v1728 = vunpack.c.l.b16 %v1664
  %v1729 = vunpack.c.l.b16 %v1665
  %v1730 = vunpack.c.l.b16 %v1666
  %v1731 = vunpack.c.l.b16 %v1667
  %v1732 = vunpack.c.l.b16 %v1668
  %v1733 = vunpack.c.l.b16 %v1669
  %v1734 = vunpack.c.l.b16 %v1670
  %v1735 = vunpack.c.l.b16 %v1671
  %v1736 = vunpack.c.l.b16 %v1672
  %v1737 = vunpack.c.l.b16 %v1673
  %v1738 = vunpack.c.l.b16 %v1674
  %v1739 = vunpack.c.l.b16 %v1675
  %v1740 = vunpack.c.l.b16 %v1676
  %v1741 = vpack.c.b16 %v1710, %v1709
  %v1742 = vpack.c.b16 %v1712, %v1711
  %v1743 = vpack.c.b16 %v1714, %v1713
  %v1744 = vpack.c.b16 %v1716, %v1715
  %v1745 = vpack.c.b16 %v1718, %v1717
  %v1746 = vpack.c.b16 %v1720, %v1719
  %v1747 = vpack.c.b16 %v1722, %v1721
  %v1748 = vpack.c.b16 %v1724, %v1723
  %v1749 = vpack.c.b16 %v1726, %v1725
  %v1750 = vpack.c.b16 %v1728, %v1727
  %v1751 = vpack.c.b16 %v1730, %v1729
  %v1752 = vpack.c.b16 %v1732, %v1731
  %v1753 = vpack.c.b16 %v1734, %v1733
  %v1754 = vpack.c.b16 %v1736, %v1735
  %v1755 = vpack.c.b16 %v1738, %v1737
  %v1756 = vpack.c.b16 %v1740, %v1739
  %1773 = vmatprep.subr.bf16.mxu0 0
  %1774 = vmatpush1.bf16.msra.mxu0 %v1741
  %1775 = vmatprep.subr.bf16.mxu0 0
  %1776 = vmatpush1.bf16.msra.mxu0 %v1742
  %1777 = vmatprep.subr.bf16.mxu0 0
  %1778 = vmatpush1.bf16.msra.mxu0 %v1743
  %1779 = vmatprep.subr.bf16.mxu0 0
  %1780 = vmatpush1.bf16.msra.mxu0 %v1744
  %1781 = vmatprep.subr.bf16.mxu0 0
  %1782 = vmatpush1.bf16.msra.mxu0 %v1745
  %1783 = vmatprep.subr.bf16.mxu0 0
  %1784 = vmatpush1.bf16.msra.mxu0 %v1746
  %1785 = vmatprep.subr.bf16.mxu0 0
  %1786 = vmatpush1.bf16.msra.mxu0 %v1747
  %1787 = vmatprep.subr.bf16.mxu0 0
  %1788 = vmatpush1.bf16.msra.mxu0 %v1748
  %1789 = vmatprep.subr.bf16.mxu0 0
  %1790 = vmatpush1.bf16.msra.mxu0 %v1749
  %1791 = vmatprep.subr.bf16.mxu0 0
  %1792 = vmatpush1.bf16.msra.mxu0 %v1750
  %1793 = vmatprep.subr.bf16.mxu0 0
  %1794 = vmatpush1.bf16.msra.mxu0 %v1751
  %1795 = vmatprep.subr.bf16.mxu0 0
  %1796 = vmatpush1.bf16.msra.mxu0 %v1752
  %1797 = vmatprep.subr.bf16.mxu0 0
  %1798 = vmatpush1.bf16.msra.mxu0 %v1753
  %1799 = vmatprep.subr.bf16.mxu0 0
  %1800 = vmatpush1.bf16.msra.mxu0 %v1754
  %1801 = vmatprep.subr.bf16.mxu0 0
  %1802 = vmatpush1.bf16.msra.mxu0 %v1755
  %1803 = vmatprep.subr.bf16.mxu0 0
  %1804 = vmatpush1.bf16.msra.mxu0 %v1756
  %1805 = vmatprep.mubr.bf16.mxu0 %v1643
  %1806 = vmatmul.mubr.bf16.gmra.mrb[0].mxu0 %v1642
  %v1807 = vpop.f32.mrb[0].mxu0
  %v1808 = vadd.f32 %v944, %v1807
  %v1809 = vpop.f32.mrb[0].mxu0
  %v1810 = vpop.f32.mrb[0].mxu0
  %v1811 = vadd.f32 %v944, %v1810
  %v1812 = vpop.f32.mrb[0].mxu0
  %1813 = vdwg.mxu0
  %v1814 = vadd.f32 %v1553, %v1808
  %v1815 = vadd.f32 %v1554, %v1811
  %v1816 = vsel %vm59, %v1814, 0.0
  %1817 = vadd.xlane.f32.xlu0 %v1816
  %v1818 = vpop.xlane.xlu0 %1817
  %v1819 = vsel %vm59, %v1815, 0.0
  %1820 = vadd.xlane.f32.xlu0 %v1819
  %v1821 = vpop.xlane.xlu0 %1820
  %v1822 = vmul.f32 %v1818, %v626
  %v1823 = vmul.f32 %v1821, %v626
  %v1824 = vsub.f32 %v1814, %v1822
  %v1825 = vsub.f32 %v1815, %v1823
  %v1826 = vmul.f32 %v1824, %v1824
  %v1827 = vmul.f32 %v1825, %v1825
  %v1828 = vsel %vm59, %v1826, 0.0
  %1829 = vadd.xlane.f32.xlu0 %v1828
  %v1830 = vpop.xlane.xlu0 %1829
  %v1831 = vsel %vm59, %v1827, 0.0
  %1832 = vadd.xlane.f32.xlu0 %v1831
  %v1833 = vpop.xlane.xlu0 %1832
  %v1834 = vmul.f32 %v1830, %v626
  %v1835 = vmul.f32 %v1833, %v626
  %v1836 = vadd.f32 %v1834, 1e-05
  %v1837 = vadd.f32 %v1835, 1e-05
  %v1838 = vrsqrt.pop %v1836
  %v1839 = vrsqrt.pop %v1837
  %v1840 = vmul.f32 %v1824, %v1838
  %v1841 = vmul.f32 %v1825, %v1839
  %v1842 = vmul.f32 %v1840, %v947
  %v1843 = vmul.f32 %v1841, %v947
  %v1844 = vadd.f32 %v1842, %v948
  %v1845 = vadd.f32 %v1843, %v948
  %v1846 = vld [vmem:[%s6 + $0x20] ss:$0 sm:$0xff]
  %v1847 = vpack.c.bf16 %v1845, %v1844
  %v1848 = vld [vmem:[%s7] sm:$0xf]
  %v1849 = vld [vmem:[%s7 + $0x4] sm:$0xf]
  %v1850 = vld [vmem:[%s7 + $0x8] sm:$0xf]
  %v1851 = vld [vmem:[%s7 + $0xc] sm:$0xf]
  %v1856 = vunpack.c.l.b16 %v1848
  %v1857 = vunpack.c.l.b16 %v1849
  %v1858 = vunpack.c.l.b16 %v1850
  %v1859 = vunpack.c.l.b16 %v1851
  %v1860 = vpack.c.b16 %v1857, %v1856
  %v1861 = vpack.c.b16 %v1859, %v1858
  %v1865 = vsel %vm59, %v1847, 0
  %1867 = vmatprep.subr.bf16.mxu0 0
  %1868 = vmatpush1.bf16.msra.mxu0 %v1860
  %1869 = vmatprep.subr.bf16.mxu0 0
  %1870 = vmatpush1.bf16.msra.mxu0 %v1861
  %1871 = vmatprep.subr.bf16.mxu0 0
  %1872 = vmatpush1.bf16.msra.mxu0 0
  %1873 = vmatprep.subr.bf16.mxu0 0
  %1874 = vmatpush1.bf16.msra.mxu0 0
  %1875 = vmatprep.subr.bf16.mxu0 0
  %1876 = vmatpush1.bf16.msra.mxu0 0
  %1877 = vmatprep.subr.bf16.mxu0 0
  %1878 = vmatpush1.bf16.msra.mxu0 0
  %1879 = vmatprep.subr.bf16.mxu0 0
  %1880 = vmatpush1.bf16.msra.mxu0 0
  %1881 = vmatprep.subr.bf16.mxu0 0
  %1882 = vmatpush1.bf16.msra.mxu0 0
  %1883 = vmatprep.subr.bf16.mxu0 0
  %1884 = vmatpush1.bf16.msra.mxu0 0
  %1885 = vmatprep.subr.bf16.mxu0 0
  %1886 = vmatpush1.bf16.msra.mxu0 0
  %1887 = vmatprep.subr.bf16.mxu0 0
  %1888 = vmatpush1.bf16.msra.mxu0 0
  %1889 = vmatprep.subr.bf16.mxu0 0
  %1890 = vmatpush1.bf16.msra.mxu0 0
  %1891 = vmatprep.subr.bf16.mxu0 0
  %1892 = vmatpush1.bf16.msra.mxu0 0
  %1893 = vmatprep.subr.bf16.mxu0 0
  %1894 = vmatpush1.bf16.msra.mxu0 0
  %1895 = vmatprep.subr.bf16.mxu0 0
  %1896 = vmatpush1.bf16.msra.mxu0 0
  %1897 = vmatprep.subr.bf16.mxu0 0
  %1898 = vmatpush1.bf16.msra.mxu0 0
  %1899 = vmatprep.mubr.bf16.mxu0 0
  %1900 = vmatmul.mubr.bf16.gmra.mrb[0].mxu0 %v1865
  %v1901 = vpop.f32.mrb[0].mxu0
  %v1902 = vadd.f32 %v1846, %v1901
  %v1903 = vpop.f32.mrb[0].mxu0
  %v1904 = vpop.f32.mrb[0].mxu0
  %v1905 = vadd.f32 %v1846, %v1904
  %v1906 = vpop.f32.mrb[0].mxu0
  %1907 = vdwg.mxu0
  %1908 = vst [vmem:[%s8] sm:$0xff] %v1902
  %1909 = vst [vmem:[%s8 + $0x8] sm:$0xff] %v1905
  // Predicated region
  $region34: #{transformer_forward.1} parent=0 // pred_check
    _
  $region35: #{transformer_forward.1} parent=0 // pred_check_branch
    %1911 = sbr.rel (0) target = $region37
  $region36: #{transformer_forward.1} parent=0 // pred_region
    _
  $region37: #{transformer_forward.1} parent=0 // pred_fallthru
    _
  // Predicated region
  $region38: #{transformer_forward.1} parent=0 // pred_check
    _
  $region39: #{transformer_forward.1} parent=0 // pred_check_branch
    %1913 = sbr.rel (0) target = $region41
  $region40: #{transformer_forward.1} parent=0 // pred_region
    _
  $region41: #{transformer_forward.1} parent=0 // pred_fallthru
    _

</llo_original>
